<compile_context>
chip_gen: v7x
topology: tpu7x:2x2x1
jax: 0.10.0
libtpu: 0.0.40
codegen_flags: <defaults>
</compile_context>

<pallas_src>
import math
import functools

import jax
import jax.numpy as jnp
from jax import lax
from jax.experimental import pallas as pl
from jax.experimental.pallas import tpu as pltpu


def _layernorm_onepass(x, g, b, eps=1e-5):
    # One cross-lane reduce pair: mu and E[x^2] share the same reduction structure.
    mu = jnp.mean(x, axis=-1, keepdims=True)
    var = jnp.maximum(jnp.mean(x * x, axis=-1, keepdims=True) - mu * mu, 0.0)
    return (x - mu) * lax.rsqrt(var + eps) * g + b


def _gelu_new(x):
    # HF "gelu_new": 0.5*x*(1+tanh(sqrt(2/pi)*(x+0.044715*x^3)))
    return 0.5 * x * (1.0 + jnp.tanh(math.sqrt(2.0 / math.pi) * (x + 0.044715 * x * x * x)))


# vecpack row layout (each row is a parameter vector padded to the packed lane width):
#   0 ln1g  1 ln1b  2 ln2g  3 ln2b  4 bq(scaled)  5 bk|bv  6 bo  7 lnfg  8 lnfb  9 b1  10 b2
_N_VEC_ROWS = 11


def perceiver_layer_kernel(num_heads, bps, M, N, Dq, Dkv, QK, V, Hid, out_pad,
                           hs_ref, inp_ref, vec_ref,
                           wq_ref, wkv_ref, wo_ref, w1_ref, w2_ref,
                           out_ref):
    dqk = QK // num_heads
    dv = V // num_heads

    hs = hs_ref[...].reshape(bps * M, Dq)       # (bps*M, Dq)  — rows stacked on sublanes
    inp = inp_ref[...].reshape(bps * N, Dkv)    # (bps*N, Dkv)

    def row(i, w):                              # one packed parameter vector, kept 2D (1, w)
        return vec_ref[i:i + 1, 0:w]

    # ---- LayerNorms + fused QKV projections (1/sqrt(d_head) already folded into Wq/bq) ----
    q_in = _layernorm_onepass(hs, row(0, Dq), row(1, Dq))
    kv_in = _layernorm_onepass(inp, row(2, Dkv), row(3, Dkv))

    q = jnp.dot(q_in, wq_ref[...], preferred_element_type=jnp.float32) + row(4, QK)
    kv = jnp.dot(kv_in, wkv_ref[...], preferred_element_type=jnp.float32) + row(5, QK + V)

    wo = wo_ref[...]                             # (V, Dq)
    bo = row(6, Dq)

    # ---- attention: fused per-(batch, head) softmax, lane-concat heads, one Wo dot/batch ----
    attn_tiles = []
    for b in range(bps):                         # static loops; all slices are static
        qb = q[b * M:(b + 1) * M, :]             # (M, QK)
        kb = kv[b * N:(b + 1) * N, 0:QK]         # (N, QK)
        vb = kv[b * N:(b + 1) * N, QK:QK + V]    # (N, V)
        kbT = jnp.transpose(kb)                  # (QK, N): one XLU transpose per batch element

        ctx_heads = []
        for h in range(num_heads):
            qh = qb[:, h * dqk:(h + 1) * dqk]                    # (M, dqk)
            kTh = kbT[h * dqk:(h + 1) * dqk, :]                  # (dqk, N)
            s = jnp.dot(qh, kTh, preferred_element_type=jnp.float32)   # (M, N)
            # fused, numerically-stable softmax on this tile (EUP exp / reciprocal, XLU max/sum)
            s = s - jnp.max(s, axis=-1, keepdims=True)
            p = jnp.exp(s)
            p = p * pl.reciprocal(jnp.sum(p, axis=-1, keepdims=True), approx=True)
            ctx_heads.append(jnp.dot(p, vb[:, h * dv:(h + 1) * dv],
                                     preferred_element_type=jnp.float32))  # (M, dv)

        # lane-concat of aligned dv-wide chunks -> (M, V); single output-projection dot.
        ctx_full = ctx_heads[0] if num_heads == 1 else jnp.concatenate(ctx_heads, axis=-1)
        attn_b = (jnp.dot(ctx_full, wo, preferred_element_type=jnp.float32)
                  + bo + hs[b * M:(b + 1) * M, :])               # query residual + bias
        attn_tiles.append(attn_b)

    attn = attn_tiles[0] if bps == 1 else jnp.concatenate(attn_tiles, axis=0)  # (bps*M, Dq)

    # ---- PerceiverLayer: LayerNorm -> MLP (gelu_new) -> residual ----
    ln_out = _layernorm_onepass(attn, row(7, Dq), row(8, Dq))
    h1 = _gelu_new(jnp.dot(ln_out, w1_ref[...],
                           preferred_element_type=jnp.float32) + row(9, Hid))
    mlp = jnp.dot(h1, w2_ref[...], preferred_element_type=jnp.float32) + row(10, Dq) + attn

    # ---- single lane-dense packed output store: [attn | mlp | zero-pad] ----
    pad = out_pad - 2 * Dq
    pieces = [attn, mlp]
    if pad > 0:
        pieces.append(jnp.zeros((bps * M, pad), jnp.float32))
    slab = jnp.concatenate(pieces, axis=-1)                      # (bps*M, out_pad)
    out_ref[...] = slab.reshape(bps, M, out_pad)


def _pick_bps(B, M, N, Dq, Dkv, out_pad, fold_batch):
    """Batch elements per grid step, generation-aware."""
    if fold_batch is True:
        return B
    if fold_batch is False:
        return 1

    try:
        kind = jax.devices()[0].device_kind.lower()
    except Exception:
        kind = ""
    is_v7 = "v7" in kind
    is_v5e = ("v5e" in kind) or ("v5 lite" in kind) or ("v5litepod" in kind)

    # Fill ~128 MXU rows/dot on v5e, ~256 on v6e/v7x.
    target_rows = 128 if is_v5e else 256
    bps = max(1, min(B, target_rows // max(M, 1)))

    # v7x has 2 TensorCores: 2 grid steps is enough to use both; don't shrink below that.
    if is_v7:
        bps = min(bps, max(1, -(-B // 2)))      # cdiv(B, 2)

    # Crude VMEM cap (double-buffered per-step blocks, f32); tighter budget on v7x (64 MiB).
    budget = (16 if is_v7 else 32) << 20
    def step_bytes(b):
        return 2 * 4 * b * (M * Dq + N * Dkv + M * out_pad)
    while bps > 1 and step_bytes(bps) > budget:
        bps //= 2

    # bps must divide B for a clean grid.
    while B % bps != 0:
        bps -= 1
    return bps


def perceiver_layer(hidden_states, inputs, params, num_heads, fold_batch=None):
    B, M, Dq = hidden_states.shape
    _, N, Dkv = inputs.shape
    QK = params["wq"].shape[1]
    V = params["wv"].shape[1]
    Hid = params["w1"].shape[1]
    dqk = QK // num_heads
    scale = 1.0 / math.sqrt(dqk)
    out_pad = ((2 * Dq + 127) // 128) * 128      # lane-dense packed output width

    bps = _pick_bps(B, M, N, Dq, Dkv, out_pad, fold_batch)
    steps = B // bps

    f32 = jnp.float32
    # ---- host-side packing (exact transformations) ----
    wq = params["wq"].astype(f32) * scale              # fold 1/sqrt(d_head) into Wq/bq
    bq = params["bq"].astype(f32) * scale
    wkv = jnp.concatenate([params["wk"], params["wv"]], axis=1).astype(f32)
    bkv = jnp.concatenate([params["bk"], params["bv"]], axis=1).astype(f32)
    wo = params["wo"].astype(f32)
    w1 = params["w1"].astype(f32)
    w2 = params["w2"].astype(f32)
    # TODO(synk): at realistic Perceiver sizes (q_dim/Hid >= 128, large N) cast the matmul
    # operands/weights to bf16 (keep LN/softmax/gelu math f32); at these toy dims f32 is cheaper.

    vec_rows = [params["ln1g"], params["ln1b"], params["ln2g"], params["ln2b"],
                bq, bkv, params["bo"], params["lnfg"], params["lnfb"],
                params["b1"], params["b2"]]
    assert len(vec_rows) == _N_VEC_ROWS
    max_w = max(int(r.reshape(1, -1).shape[1]) for r in vec_rows)
    pack_w = ((max_w + 127) // 128) * 128

    def pad_row(r):
        r = r.reshape(1, -1).astype(f32)
        return jnp.pad(r, ((0, 0), (0, pack_w - r.shape[1])))

    vecpack = jnp.concatenate([pad_row(r) for r in vec_rows], axis=0)
    pad_rows = (-vecpack.shape[0]) % 8
    if pad_rows:
        vecpack = jnp.pad(vecpack, ((0, pad_rows), (0, 0)))

    kernel = functools.partial(perceiver_layer_kernel,
                               num_heads, bps, M, N, Dq, Dkv, QK, V, Hid, out_pad)

    def full2d(a):
        return pl.BlockSpec(a.shape, lambda s: (0, 0))

    in_specs = [
        pl.BlockSpec((bps, M, Dq), lambda s: (s, 0, 0)),
        pl.BlockSpec((bps, N, Dkv), lambda s: (s, 0, 0)),
        full2d(vecpack), full2d(wq), full2d(wkv), full2d(wo), full2d(w1), full2d(w2),
    ]
    out_spec = pl.BlockSpec((bps, M, out_pad), lambda s: (s, 0, 0))
    out_shape = jax.ShapeDtypeStruct((B, M, out_pad), f32)

    packed = pl.pallas_call(
        kernel,
        grid=(steps,),
        in_specs=in_specs,
        out_specs=out_spec,
        out_shape=out_shape,
        compiler_params=pltpu.CompilerParams(
            dimension_semantics=("parallel",) if steps > 1 else ("arbitrary",)),
    )(hidden_states.astype(f32), inputs.astype(f32),
      vecpack, wq, wkv, wo, w1, w2)

    # Pad lanes (zeroed in-kernel) are sliced away here.
    return {"attention": packed[..., :Dq], "mlp": packed[..., Dq:2 * Dq]}


def perceiver_layer_reference(hs, inp, p, num_heads):
    """Pure-JAX reference mirroring the PyTorch forward (eval, masks=None)."""
    def ln(x, g, b, eps=1e-5):
        mu = jnp.mean(x, axis=-1, keepdims=True)
        var = jnp.mean((x - mu) ** 2, axis=-1, keepdims=True)
        return (x - mu) * lax.rsqrt(var + eps) * g + b

    q_in = ln(hs, p["ln1g"][0], p["ln1b"][0])
    kv_in = ln(inp, p["ln2g"][0], p["ln2b"][0])
    q = q_in @ p["wq"] + p["bq"][0]
    k = kv_in @ p["wk"] + p["bk"][0]
    v = kv_in @ p["wv"] + p["bv"][0]
    B, M, QK = q.shape
    N = k.shape[1]
    V = v.shape[-1]
    dqk, dv = QK // num_heads, V // num_heads
    qh = q.reshape(B, M, num_heads, dqk).transpose(0, 2, 1, 3)
    kh = k.reshape(B, N, num_heads, dqk).transpose(0, 2, 1, 3)
    vh = v.reshape(B, N, num_heads, dv).transpose(0, 2, 1, 3)
    s = jnp.einsum("bhmd,bhnd->bhmn", qh, kh) / math.sqrt(dqk)
    prob = jax.nn.softmax(s, axis=-1)
    ctx = jnp.einsum("bhmn,bhnd->bhmd", prob, vh)
    ctx = ctx.transpose(0, 2, 1, 3).reshape(B, M, V)
    attn = ctx @ p["wo"] + p["bo"][0] + hs
    ln_out = ln(attn, p["lnfg"][0], p["lnfb"][0])
    mlp = _gelu_new(ln_out @ p["w1"] + p["b1"][0]) @ p["w2"] + p["b2"][0] + attn
    return {"attention": attn, "mlp": mlp}


if __name__ == "__main__":
    # Small cross-attention configuration.
    B, M, N = 2, 8, 16
    q_dim, kv_dim = 32, 16
    qk_channels, v_channels = 32, 32
    num_heads = 4
    widening_factor = 2
    hidden_dim = widening_factor * q_dim

    key = jax.random.PRNGKey(0)
    ks = jax.random.split(key, 24)

    def nrm(k, shape, s=0.05):
        return jax.random.normal(k, shape, jnp.float32) * s

    params = {
        "ln1g": 1.0 + nrm(ks[0], (1, q_dim)), "ln1b": nrm(ks[1], (1, q_dim)),
        "ln2g": 1.0 + nrm(ks[2], (1, kv_dim)), "ln2b": nrm(ks[3], (1, kv_dim)),
        "wq": nrm(ks[4], (q_dim, qk_channels)), "bq": nrm(ks[5], (1, qk_channels)),
        "wk": nrm(ks[6], (kv_dim, qk_channels)), "bk": nrm(ks[7], (1, qk_channels)),
        "wv": nrm(ks[8], (kv_dim, v_channels)), "bv": nrm(ks[9], (1, v_channels)),
        "wo": nrm(ks[10], (v_channels, q_dim)), "bo": nrm(ks[11], (1, q_dim)),
        "lnfg": 1.0 + nrm(ks[12], (1, q_dim)), "lnfb": nrm(ks[13], (1, q_dim)),
        "w1": nrm(ks[14], (q_dim, hidden_dim)), "b1": nrm(ks[15], (1, hidden_dim)),
        "w2": nrm(ks[16], (hidden_dim, q_dim)), "b2": nrm(ks[17], (1, q_dim)),
    }

    hs = jax.random.normal(ks[18], (B, M, q_dim), jnp.float32)       # latents (queries)
    inp = jax.random.normal(ks[19], (B, N, kv_dim), jnp.float32)     # cross-attention inputs

    ref = perceiver_layer_reference(hs, inp, params, num_heads)

    # Exercise fold (single-step), unfold (batch-parallel grid), and the auto default.
    # Tolerance is relaxed for the approx softmax reciprocal + one-pass LayerNorm.
    for fold in (True, False, None):
        out = perceiver_layer(hs, inp, params, num_heads, fold_batch=fold)
        jax.block_until_ready(out)
        assert jnp.allclose(out["attention"], ref["attention"], atol=2e-3, rtol=2e-3), fold
        assert jnp.allclose(out["mlp"], ref["mlp"], atol=2e-3, rtol=2e-3), fold

    print("KERNEL_OK")
</pallas_src>

<mosaic_0001>
module attributes {stable_mosaic.version = 11 : i64} {
  func.func @perceiver_layer_kernel(%arg0: i32, %arg1: memref<2x8x32xf32, #tpu.memory_space<vmem>>, %arg2: memref<2x16x16xf32, #tpu.memory_space<vmem>>, %arg3: memref<16x128xf32, #tpu.memory_space<vmem>>, %arg4: memref<32x32xf32, #tpu.memory_space<vmem>>, %arg5: memref<16x64xf32, #tpu.memory_space<vmem>>, %arg6: memref<32x32xf32, #tpu.memory_space<vmem>>, %arg7: memref<32x64xf32, #tpu.memory_space<vmem>>, %arg8: memref<64x32xf32, #tpu.memory_space<vmem>>, %arg9: memref<2x8x128xf32, #tpu.memory_space<vmem>>) attributes {dimension_semantics = [#tpu.dimension_semantics<arbitrary>], iteration_bounds = array<i64: 1>, scalar_prefetch = 0 : i64, scratch_operands = 0 : i64, tpu.core_type = #tpu.core_type<tc>, window_params = [{transform_indices = @transform_0, window_bounds = array<i64: 2, 8, 32>}, {transform_indices = @transform_1, window_bounds = array<i64: 2, 16, 16>}, {pipeline_mode = #tpu.pipeline_mode<synchronous>, transform_indices = @transform_2, window_bounds = array<i64: 16, 128>}, {pipeline_mode = #tpu.pipeline_mode<synchronous>, transform_indices = @transform_3, window_bounds = array<i64: 32, 32>}, {pipeline_mode = #tpu.pipeline_mode<synchronous>, transform_indices = @transform_4, window_bounds = array<i64: 16, 64>}, {pipeline_mode = #tpu.pipeline_mode<synchronous>, transform_indices = @transform_5, window_bounds = array<i64: 32, 32>}, {pipeline_mode = #tpu.pipeline_mode<synchronous>, transform_indices = @transform_6, window_bounds = array<i64: 32, 64>}, {pipeline_mode = #tpu.pipeline_mode<synchronous>, transform_indices = @transform_7, window_bounds = array<i64: 64, 32>}, {transform_indices = @transform_8, window_bounds = array<i64: 2, 8, 128>}]} {
    %c0 = arith.constant 0 : index
    %c0_0 = arith.constant 0 : index
    %c0_1 = arith.constant 0 : index
    %0 = vector.load %arg1[%c0, %c0_0, %c0_1] : memref<2x8x32xf32, #tpu.memory_space<vmem>>, vector<2x8x32xf32>
    %1 = vector.shape_cast %0 : vector<2x8x32xf32> to vector<16x32xf32>
    %c0_2 = arith.constant 0 : index
    %c0_3 = arith.constant 0 : index
    %c0_4 = arith.constant 0 : index
    %2 = vector.load %arg2[%c0_2, %c0_3, %c0_4] : memref<2x16x16xf32, #tpu.memory_space<vmem>>, vector<2x16x16xf32>
    %3 = vector.shape_cast %2 : vector<2x16x16xf32> to vector<32x16xf32>
    %c0_5 = arith.constant 0 : index
    %c0_6 = arith.constant 0 : index
    %4 = vector.load %arg3[%c0_5, %c0_6] : memref<16x128xf32, #tpu.memory_space<vmem>>, vector<1x32xf32>
    %c1 = arith.constant 1 : index
    %c0_7 = arith.constant 0 : index
    %5 = vector.load %arg3[%c1, %c0_7] : memref<16x128xf32, #tpu.memory_space<vmem>>, vector<1x32xf32>
    %cst = arith.constant dense<0.000000e+00> : vector<16xf32>
    %6 = vector.multi_reduction <add>, %1, %cst [1] : vector<16x32xf32> to vector<16xf32>
    %7 = vector.shape_cast %6 : vector<16xf32> to vector<16x1xf32>
    %cst_8 = arith.constant 3.200000e+01 : f32
    %8 = vector.broadcast %cst_8 : f32 to vector<16x1xf32>
    %9 = arith.divf %7, %8 : vector<16x1xf32>
    %10 = arith.mulf %1, %1 : vector<16x32xf32>
    %cst_9 = arith.constant dense<0.000000e+00> : vector<16xf32>
    %11 = vector.multi_reduction <add>, %10, %cst_9 [1] : vector<16x32xf32> to vector<16xf32>
    %12 = vector.shape_cast %11 : vector<16xf32> to vector<16x1xf32>
    %cst_10 = arith.constant 3.200000e+01 : f32
    %13 = vector.broadcast %cst_10 : f32 to vector<16x1xf32>
    %14 = arith.divf %12, %13 : vector<16x1xf32>
    %15 = arith.mulf %9, %9 : vector<16x1xf32>
    %16 = arith.subf %14, %15 : vector<16x1xf32>
    %cst_11 = arith.constant 0.000000e+00 : f32
    %17 = vector.broadcast %cst_11 : f32 to vector<16x1xf32>
    %18 = arith.maximumf %16, %17 : vector<16x1xf32>
    %19 = vector.broadcast %9 : vector<16x1xf32> to vector<16x32xf32>
    %20 = arith.subf %1, %19 : vector<16x32xf32>
    %cst_12 = arith.constant 9.99999974E-6 : f32
    %21 = vector.broadcast %cst_12 : f32 to vector<16x1xf32>
    %22 = arith.addf %18, %21 : vector<16x1xf32>
    %23 = math.rsqrt %22 : vector<16x1xf32>
    %24 = vector.broadcast %23 : vector<16x1xf32> to vector<16x32xf32>
    %25 = arith.mulf %20, %24 : vector<16x32xf32>
    %26 = vector.broadcast %4 : vector<1x32xf32> to vector<16x32xf32>
    %27 = arith.mulf %25, %26 : vector<16x32xf32>
    %28 = vector.broadcast %5 : vector<1x32xf32> to vector<16x32xf32>
    %29 = arith.addf %27, %28 : vector<16x32xf32>
    %c2 = arith.constant 2 : index
    %c0_13 = arith.constant 0 : index
    %30 = vector.load %arg3[%c2, %c0_13] : memref<16x128xf32, #tpu.memory_space<vmem>>, vector<1x16xf32>
    %c3 = arith.constant 3 : index
    %c0_14 = arith.constant 0 : index
    %31 = vector.load %arg3[%c3, %c0_14] : memref<16x128xf32, #tpu.memory_space<vmem>>, vector<1x16xf32>
    %cst_15 = arith.constant dense<0.000000e+00> : vector<32xf32>
    %32 = vector.multi_reduction <add>, %3, %cst_15 [1] : vector<32x16xf32> to vector<32xf32>
    %33 = vector.shape_cast %32 : vector<32xf32> to vector<32x1xf32>
    %cst_16 = arith.constant 1.600000e+01 : f32
    %34 = vector.broadcast %cst_16 : f32 to vector<32x1xf32>
    %35 = arith.divf %33, %34 : vector<32x1xf32>
    %36 = arith.mulf %3, %3 : vector<32x16xf32>
    %cst_17 = arith.constant dense<0.000000e+00> : vector<32xf32>
    %37 = vector.multi_reduction <add>, %36, %cst_17 [1] : vector<32x16xf32> to vector<32xf32>
    %38 = vector.shape_cast %37 : vector<32xf32> to vector<32x1xf32>
    %cst_18 = arith.constant 1.600000e+01 : f32
    %39 = vector.broadcast %cst_18 : f32 to vector<32x1xf32>
    %40 = arith.divf %38, %39 : vector<32x1xf32>
    %41 = arith.mulf %35, %35 : vector<32x1xf32>
    %42 = arith.subf %40, %41 : vector<32x1xf32>
    %cst_19 = arith.constant 0.000000e+00 : f32
    %43 = vector.broadcast %cst_19 : f32 to vector<32x1xf32>
    %44 = arith.maximumf %42, %43 : vector<32x1xf32>
    %45 = vector.broadcast %35 : vector<32x1xf32> to vector<32x16xf32>
    %46 = arith.subf %3, %45 : vector<32x16xf32>
    %cst_20 = arith.constant 9.99999974E-6 : f32
    %47 = vector.broadcast %cst_20 : f32 to vector<32x1xf32>
    %48 = arith.addf %44, %47 : vector<32x1xf32>
    %49 = math.rsqrt %48 : vector<32x1xf32>
    %50 = vector.broadcast %49 : vector<32x1xf32> to vector<32x16xf32>
    %51 = arith.mulf %46, %50 : vector<32x16xf32>
    %52 = vector.broadcast %30 : vector<1x16xf32> to vector<32x16xf32>
    %53 = arith.mulf %51, %52 : vector<32x16xf32>
    %54 = vector.broadcast %31 : vector<1x16xf32> to vector<32x16xf32>
    %55 = arith.addf %53, %54 : vector<32x16xf32>
    %c0_21 = arith.constant 0 : index
    %c0_22 = arith.constant 0 : index
    %56 = vector.load %arg4[%c0_21, %c0_22] : memref<32x32xf32, #tpu.memory_space<vmem>>, vector<32x32xf32>
    %cst_23 = arith.constant dense<0.000000e+00> : vector<16x32xf32>
    %57 = tpu.matmul %29, %56, %cst_23 {dimension_numbers = #tpu.dot_dimension_numbers<[1], [0], [0], [1], [0, 0, 1, 1], [], []>} : vector<16x32xf32>, vector<32x32xf32>, vector<16x32xf32> -> vector<16x32xf32>
    %c4 = arith.constant 4 : index
    %c0_24 = arith.constant 0 : index
    %58 = vector.load %arg3[%c4, %c0_24] : memref<16x128xf32, #tpu.memory_space<vmem>>, vector<1x32xf32>
    %59 = vector.broadcast %58 : vector<1x32xf32> to vector<16x32xf32>
    %60 = arith.addf %57, %59 : vector<16x32xf32>
    %c0_25 = arith.constant 0 : index
    %c0_26 = arith.constant 0 : index
    %61 = vector.load %arg5[%c0_25, %c0_26] : memref<16x64xf32, #tpu.memory_space<vmem>>, vector<16x64xf32>
    %cst_27 = arith.constant dense<0.000000e+00> : vector<32x64xf32>
    %62 = tpu.matmul %55, %61, %cst_27 {dimension_numbers = #tpu.dot_dimension_numbers<[1], [0], [0], [1], [0, 0, 1, 1], [], []>} : vector<32x16xf32>, vector<16x64xf32>, vector<32x64xf32> -> vector<32x64xf32>
    %c5 = arith.constant 5 : index
    %c0_28 = arith.constant 0 : index
    %63 = vector.load %arg3[%c5, %c0_28] : memref<16x128xf32, #tpu.memory_space<vmem>>, vector<1x64xf32>
    %64 = vector.broadcast %63 : vector<1x64xf32> to vector<32x64xf32>
    %65 = arith.addf %62, %64 : vector<32x64xf32>
    %c0_29 = arith.constant 0 : index
    %c0_30 = arith.constant 0 : index
    %66 = vector.load %arg6[%c0_29, %c0_30] : memref<32x32xf32, #tpu.memory_space<vmem>>, vector<32x32xf32>
    %c6 = arith.constant 6 : index
    %c0_31 = arith.constant 0 : index
    %67 = vector.load %arg3[%c6, %c0_31] : memref<16x128xf32, #tpu.memory_space<vmem>>, vector<1x32xf32>
    %68 = vector.extract_strided_slice %60 {offsets = [0, 0], sizes = [8, 32], strides = [1, 1]} : vector<16x32xf32> to vector<8x32xf32>
    %69 = vector.extract_strided_slice %65 {offsets = [0, 0], sizes = [16, 32], strides = [1, 1]} : vector<32x64xf32> to vector<16x32xf32>
    %70 = vector.extract_strided_slice %65 {offsets = [0, 32], sizes = [16, 32], strides = [1, 1]} : vector<32x64xf32> to vector<16x32xf32>
    %71 = tpu.transpose %69, [1, 0] : vector<16x32xf32> -> vector<32x16xf32>
    %72 = vector.extract_strided_slice %68 {offsets = [0, 0], sizes = [8, 8], strides = [1, 1]} : vector<8x32xf32> to vector<8x8xf32>
    %73 = vector.extract_strided_slice %71 {offsets = [0, 0], sizes = [8, 16], strides = [1, 1]} : vector<32x16xf32> to vector<8x16xf32>
    %cst_32 = arith.constant dense<0.000000e+00> : vector<8x16xf32>
    %74 = tpu.matmul %72, %73, %cst_32 {dimension_numbers = #tpu.dot_dimension_numbers<[1], [0], [0], [1], [0, 0, 1, 1], [], []>} : vector<8x8xf32>, vector<8x16xf32>, vector<8x16xf32> -> vector<8x16xf32>
    %cst_33 = arith.constant dense<0xFF800000> : vector<8xf32>
    %75 = vector.multi_reduction <maximumf>, %74, %cst_33 [1] : vector<8x16xf32> to vector<8xf32>
    %76 = vector.shape_cast %75 : vector<8xf32> to vector<8x1xf32>
    %77 = vector.broadcast %76 : vector<8x1xf32> to vector<8x16xf32>
    %78 = arith.subf %74, %77 : vector<8x16xf32>
    %79 = math.exp %78 : vector<8x16xf32>
    %cst_34 = arith.constant dense<0.000000e+00> : vector<8xf32>
    %80 = vector.multi_reduction <add>, %79, %cst_34 [1] : vector<8x16xf32> to vector<8xf32>
    %81 = vector.shape_cast %80 : vector<8xf32> to vector<8x1xf32>
    %82 = tpu.reciprocal %81 {approx = true} : vector<8x1xf32> -> vector<8x1xf32>
    %83 = vector.broadcast %82 : vector<8x1xf32> to vector<8x16xf32>
    %84 = arith.mulf %79, %83 : vector<8x16xf32>
    %85 = vector.extract_strided_slice %70 {offsets = [0, 0], sizes = [16, 8], strides = [1, 1]} : vector<16x32xf32> to vector<16x8xf32>
    %cst_35 = arith.constant dense<0.000000e+00> : vector<8x8xf32>
    %86 = tpu.matmul %84, %85, %cst_35 {dimension_numbers = #tpu.dot_dimension_numbers<[1], [0], [0], [1], [0, 0, 1, 1], [], []>} : vector<8x16xf32>, vector<16x8xf32>, vector<8x8xf32> -> vector<8x8xf32>
    %87 = vector.extract_strided_slice %68 {offsets = [0, 8], sizes = [8, 8], strides = [1, 1]} : vector<8x32xf32> to vector<8x8xf32>
    %88 = vector.extract_strided_slice %71 {offsets = [8, 0], sizes = [8, 16], strides = [1, 1]} : vector<32x16xf32> to vector<8x16xf32>
    %cst_36 = arith.constant dense<0.000000e+00> : vector<8x16xf32>
    %89 = tpu.matmul %87, %88, %cst_36 {dimension_numbers = #tpu.dot_dimension_numbers<[1], [0], [0], [1], [0, 0, 1, 1], [], []>} : vector<8x8xf32>, vector<8x16xf32>, vector<8x16xf32> -> vector<8x16xf32>
    %cst_37 = arith.constant dense<0xFF800000> : vector<8xf32>
    %90 = vector.multi_reduction <maximumf>, %89, %cst_37 [1] : vector<8x16xf32> to vector<8xf32>
    %91 = vector.shape_cast %90 : vector<8xf32> to vector<8x1xf32>
    %92 = vector.broadcast %91 : vector<8x1xf32> to vector<8x16xf32>
    %93 = arith.subf %89, %92 : vector<8x16xf32>
    %94 = math.exp %93 : vector<8x16xf32>
    %cst_38 = arith.constant dense<0.000000e+00> : vector<8xf32>
    %95 = vector.multi_reduction <add>, %94, %cst_38 [1] : vector<8x16xf32> to vector<8xf32>
    %96 = vector.shape_cast %95 : vector<8xf32> to vector<8x1xf32>
    %97 = tpu.reciprocal %96 {approx = true} : vector<8x1xf32> -> vector<8x1xf32>
    %98 = vector.broadcast %97 : vector<8x1xf32> to vector<8x16xf32>
    %99 = arith.mulf %94, %98 : vector<8x16xf32>
    %100 = vector.extract_strided_slice %70 {offsets = [0, 8], sizes = [16, 8], strides = [1, 1]} : vector<16x32xf32> to vector<16x8xf32>
    %cst_39 = arith.constant dense<0.000000e+00> : vector<8x8xf32>
    %101 = tpu.matmul %99, %100, %cst_39 {dimension_numbers = #tpu.dot_dimension_numbers<[1], [0], [0], [1], [0, 0, 1, 1], [], []>} : vector<8x16xf32>, vector<16x8xf32>, vector<8x8xf32> -> vector<8x8xf32>
    %102 = vector.extract_strided_slice %68 {offsets = [0, 16], sizes = [8, 8], strides = [1, 1]} : vector<8x32xf32> to vector<8x8xf32>
    %103 = vector.extract_strided_slice %71 {offsets = [16, 0], sizes = [8, 16], strides = [1, 1]} : vector<32x16xf32> to vector<8x16xf32>
    %cst_40 = arith.constant dense<0.000000e+00> : vector<8x16xf32>
    %104 = tpu.matmul %102, %103, %cst_40 {dimension_numbers = #tpu.dot_dimension_numbers<[1], [0], [0], [1], [0, 0, 1, 1], [], []>} : vector<8x8xf32>, vector<8x16xf32>, vector<8x16xf32> -> vector<8x16xf32>
    %cst_41 = arith.constant dense<0xFF800000> : vector<8xf32>
    %105 = vector.multi_reduction <maximumf>, %104, %cst_41 [1] : vector<8x16xf32> to vector<8xf32>
    %106 = vector.shape_cast %105 : vector<8xf32> to vector<8x1xf32>
    %107 = vector.broadcast %106 : vector<8x1xf32> to vector<8x16xf32>
    %108 = arith.subf %104, %107 : vector<8x16xf32>
    %109 = math.exp %108 : vector<8x16xf32>
    %cst_42 = arith.constant dense<0.000000e+00> : vector<8xf32>
    %110 = vector.multi_reduction <add>, %109, %cst_42 [1] : vector<8x16xf32> to vector<8xf32>
    %111 = vector.shape_cast %110 : vector<8xf32> to vector<8x1xf32>
    %112 = tpu.reciprocal %111 {approx = true} : vector<8x1xf32> -> vector<8x1xf32>
    %113 = vector.broadcast %112 : vector<8x1xf32> to vector<8x16xf32>
    %114 = arith.mulf %109, %113 : vector<8x16xf32>
    %115 = vector.extract_strided_slice %70 {offsets = [0, 16], sizes = [16, 8], strides = [1, 1]} : vector<16x32xf32> to vector<16x8xf32>
    %cst_43 = arith.constant dense<0.000000e+00> : vector<8x8xf32>
    %116 = tpu.matmul %114, %115, %cst_43 {dimension_numbers = #tpu.dot_dimension_numbers<[1], [0], [0], [1], [0, 0, 1, 1], [], []>} : vector<8x16xf32>, vector<16x8xf32>, vector<8x8xf32> -> vector<8x8xf32>
    %117 = vector.extract_strided_slice %68 {offsets = [0, 24], sizes = [8, 8], strides = [1, 1]} : vector<8x32xf32> to vector<8x8xf32>
    %118 = vector.extract_strided_slice %71 {offsets = [24, 0], sizes = [8, 16], strides = [1, 1]} : vector<32x16xf32> to vector<8x16xf32>
    %cst_44 = arith.constant dense<0.000000e+00> : vector<8x16xf32>
    %119 = tpu.matmul %117, %118, %cst_44 {dimension_numbers = #tpu.dot_dimension_numbers<[1], [0], [0], [1], [0, 0, 1, 1], [], []>} : vector<8x8xf32>, vector<8x16xf32>, vector<8x16xf32> -> vector<8x16xf32>
    %cst_45 = arith.constant dense<0xFF800000> : vector<8xf32>
    %120 = vector.multi_reduction <maximumf>, %119, %cst_45 [1] : vector<8x16xf32> to vector<8xf32>
    %121 = vector.shape_cast %120 : vector<8xf32> to vector<8x1xf32>
    %122 = vector.broadcast %121 : vector<8x1xf32> to vector<8x16xf32>
    %123 = arith.subf %119, %122 : vector<8x16xf32>
    %124 = math.exp %123 : vector<8x16xf32>
    %cst_46 = arith.constant dense<0.000000e+00> : vector<8xf32>
    %125 = vector.multi_reduction <add>, %124, %cst_46 [1] : vector<8x16xf32> to vector<8xf32>
    %126 = vector.shape_cast %125 : vector<8xf32> to vector<8x1xf32>
    %127 = tpu.reciprocal %126 {approx = true} : vector<8x1xf32> -> vector<8x1xf32>
    %128 = vector.broadcast %127 : vector<8x1xf32> to vector<8x16xf32>
    %129 = arith.mulf %124, %128 : vector<8x16xf32>
    %130 = vector.extract_strided_slice %70 {offsets = [0, 24], sizes = [16, 8], strides = [1, 1]} : vector<16x32xf32> to vector<16x8xf32>
    %cst_47 = arith.constant dense<0.000000e+00> : vector<8x8xf32>
    %131 = tpu.matmul %129, %130, %cst_47 {dimension_numbers = #tpu.dot_dimension_numbers<[1], [0], [0], [1], [0, 0, 1, 1], [], []>} : vector<8x16xf32>, vector<16x8xf32>, vector<8x8xf32> -> vector<8x8xf32>
    %132 = tpu.concatenate %86, %101, %116, %131 in 1 : vector<8x8xf32>, vector<8x8xf32>, vector<8x8xf32>, vector<8x8xf32> -> vector<8x32xf32>
    %cst_48 = arith.constant dense<0.000000e+00> : vector<8x32xf32>
    %133 = tpu.matmul %132, %66, %cst_48 {dimension_numbers = #tpu.dot_dimension_numbers<[1], [0], [0], [1], [0, 0, 1, 1], [], []>} : vector<8x32xf32>, vector<32x32xf32>, vector<8x32xf32> -> vector<8x32xf32>
    %134 = vector.broadcast %67 : vector<1x32xf32> to vector<8x32xf32>
    %135 = arith.addf %133, %134 : vector<8x32xf32>
    %136 = vector.extract_strided_slice %1 {offsets = [0, 0], sizes = [8, 32], strides = [1, 1]} : vector<16x32xf32> to vector<8x32xf32>
    %137 = arith.addf %135, %136 : vector<8x32xf32>
    %138 = vector.extract_strided_slice %60 {offsets = [8, 0], sizes = [8, 32], strides = [1, 1]} : vector<16x32xf32> to vector<8x32xf32>
    %139 = vector.extract_strided_slice %65 {offsets = [16, 0], sizes = [16, 32], strides = [1, 1]} : vector<32x64xf32> to vector<16x32xf32>
    %140 = vector.extract_strided_slice %65 {offsets = [16, 32], sizes = [16, 32], strides = [1, 1]} : vector<32x64xf32> to vector<16x32xf32>
    %141 = tpu.transpose %139, [1, 0] : vector<16x32xf32> -> vector<32x16xf32>
    %142 = vector.extract_strided_slice %138 {offsets = [0, 0], sizes = [8, 8], strides = [1, 1]} : vector<8x32xf32> to vector<8x8xf32>
    %143 = vector.extract_strided_slice %141 {offsets = [0, 0], sizes = [8, 16], strides = [1, 1]} : vector<32x16xf32> to vector<8x16xf32>
    %cst_49 = arith.constant dense<0.000000e+00> : vector<8x16xf32>
    %144 = tpu.matmul %142, %143, %cst_49 {dimension_numbers = #tpu.dot_dimension_numbers<[1], [0], [0], [1], [0, 0, 1, 1], [], []>} : vector<8x8xf32>, vector<8x16xf32>, vector<8x16xf32> -> vector<8x16xf32>
    %cst_50 = arith.constant dense<0xFF800000> : vector<8xf32>
    %145 = vector.multi_reduction <maximumf>, %144, %cst_50 [1] : vector<8x16xf32> to vector<8xf32>
    %146 = vector.shape_cast %145 : vector<8xf32> to vector<8x1xf32>
    %147 = vector.broadcast %146 : vector<8x1xf32> to vector<8x16xf32>
    %148 = arith.subf %144, %147 : vector<8x16xf32>
    %149 = math.exp %148 : vector<8x16xf32>
    %cst_51 = arith.constant dense<0.000000e+00> : vector<8xf32>
    %150 = vector.multi_reduction <add>, %149, %cst_51 [1] : vector<8x16xf32> to vector<8xf32>
    %151 = vector.shape_cast %150 : vector<8xf32> to vector<8x1xf32>
    %152 = tpu.reciprocal %151 {approx = true} : vector<8x1xf32> -> vector<8x1xf32>
    %153 = vector.broadcast %152 : vector<8x1xf32> to vector<8x16xf32>
    %154 = arith.mulf %149, %153 : vector<8x16xf32>
    %155 = vector.extract_strided_slice %140 {offsets = [0, 0], sizes = [16, 8], strides = [1, 1]} : vector<16x32xf32> to vector<16x8xf32>
    %cst_52 = arith.constant dense<0.000000e+00> : vector<8x8xf32>
    %156 = tpu.matmul %154, %155, %cst_52 {dimension_numbers = #tpu.dot_dimension_numbers<[1], [0], [0], [1], [0, 0, 1, 1], [], []>} : vector<8x16xf32>, vector<16x8xf32>, vector<8x8xf32> -> vector<8x8xf32>
    %157 = vector.extract_strided_slice %138 {offsets = [0, 8], sizes = [8, 8], strides = [1, 1]} : vector<8x32xf32> to vector<8x8xf32>
    %158 = vector.extract_strided_slice %141 {offsets = [8, 0], sizes = [8, 16], strides = [1, 1]} : vector<32x16xf32> to vector<8x16xf32>
    %cst_53 = arith.constant dense<0.000000e+00> : vector<8x16xf32>
    %159 = tpu.matmul %157, %158, %cst_53 {dimension_numbers = #tpu.dot_dimension_numbers<[1], [0], [0], [1], [0, 0, 1, 1], [], []>} : vector<8x8xf32>, vector<8x16xf32>, vector<8x16xf32> -> vector<8x16xf32>
    %cst_54 = arith.constant dense<0xFF800000> : vector<8xf32>
    %160 = vector.multi_reduction <maximumf>, %159, %cst_54 [1] : vector<8x16xf32> to vector<8xf32>
    %161 = vector.shape_cast %160 : vector<8xf32> to vector<8x1xf32>
    %162 = vector.broadcast %161 : vector<8x1xf32> to vector<8x16xf32>
    %163 = arith.subf %159, %162 : vector<8x16xf32>
    %164 = math.exp %163 : vector<8x16xf32>
    %cst_55 = arith.constant dense<0.000000e+00> : vector<8xf32>
    %165 = vector.multi_reduction <add>, %164, %cst_55 [1] : vector<8x16xf32> to vector<8xf32>
    %166 = vector.shape_cast %165 : vector<8xf32> to vector<8x1xf32>
    %167 = tpu.reciprocal %166 {approx = true} : vector<8x1xf32> -> vector<8x1xf32>
    %168 = vector.broadcast %167 : vector<8x1xf32> to vector<8x16xf32>
    %169 = arith.mulf %164, %168 : vector<8x16xf32>
    %170 = vector.extract_strided_slice %140 {offsets = [0, 8], sizes = [16, 8], strides = [1, 1]} : vector<16x32xf32> to vector<16x8xf32>
    %cst_56 = arith.constant dense<0.000000e+00> : vector<8x8xf32>
    %171 = tpu.matmul %169, %170, %cst_56 {dimension_numbers = #tpu.dot_dimension_numbers<[1], [0], [0], [1], [0, 0, 1, 1], [], []>} : vector<8x16xf32>, vector<16x8xf32>, vector<8x8xf32> -> vector<8x8xf32>
    %172 = vector.extract_strided_slice %138 {offsets = [0, 16], sizes = [8, 8], strides = [1, 1]} : vector<8x32xf32> to vector<8x8xf32>
    %173 = vector.extract_strided_slice %141 {offsets = [16, 0], sizes = [8, 16], strides = [1, 1]} : vector<32x16xf32> to vector<8x16xf32>
    %cst_57 = arith.constant dense<0.000000e+00> : vector<8x16xf32>
    %174 = tpu.matmul %172, %173, %cst_57 {dimension_numbers = #tpu.dot_dimension_numbers<[1], [0], [0], [1], [0, 0, 1, 1], [], []>} : vector<8x8xf32>, vector<8x16xf32>, vector<8x16xf32> -> vector<8x16xf32>
    %cst_58 = arith.constant dense<0xFF800000> : vector<8xf32>
    %175 = vector.multi_reduction <maximumf>, %174, %cst_58 [1] : vector<8x16xf32> to vector<8xf32>
    %176 = vector.shape_cast %175 : vector<8xf32> to vector<8x1xf32>
    %177 = vector.broadcast %176 : vector<8x1xf32> to vector<8x16xf32>
    %178 = arith.subf %174, %177 : vector<8x16xf32>
    %179 = math.exp %178 : vector<8x16xf32>
    %cst_59 = arith.constant dense<0.000000e+00> : vector<8xf32>
    %180 = vector.multi_reduction <add>, %179, %cst_59 [1] : vector<8x16xf32> to vector<8xf32>
    %181 = vector.shape_cast %180 : vector<8xf32> to vector<8x1xf32>
    %182 = tpu.reciprocal %181 {approx = true} : vector<8x1xf32> -> vector<8x1xf32>
    %183 = vector.broadcast %182 : vector<8x1xf32> to vector<8x16xf32>
    %184 = arith.mulf %179, %183 : vector<8x16xf32>
    %185 = vector.extract_strided_slice %140 {offsets = [0, 16], sizes = [16, 8], strides = [1, 1]} : vector<16x32xf32> to vector<16x8xf32>
    %cst_60 = arith.constant dense<0.000000e+00> : vector<8x8xf32>
    %186 = tpu.matmul %184, %185, %cst_60 {dimension_numbers = #tpu.dot_dimension_numbers<[1], [0], [0], [1], [0, 0, 1, 1], [], []>} : vector<8x16xf32>, vector<16x8xf32>, vector<8x8xf32> -> vector<8x8xf32>
    %187 = vector.extract_strided_slice %138 {offsets = [0, 24], sizes = [8, 8], strides = [1, 1]} : vector<8x32xf32> to vector<8x8xf32>
    %188 = vector.extract_strided_slice %141 {offsets = [24, 0], sizes = [8, 16], strides = [1, 1]} : vector<32x16xf32> to vector<8x16xf32>
    %cst_61 = arith.constant dense<0.000000e+00> : vector<8x16xf32>
    %189 = tpu.matmul %187, %188, %cst_61 {dimension_numbers = #tpu.dot_dimension_numbers<[1], [0], [0], [1], [0, 0, 1, 1], [], []>} : vector<8x8xf32>, vector<8x16xf32>, vector<8x16xf32> -> vector<8x16xf32>
    %cst_62 = arith.constant dense<0xFF800000> : vector<8xf32>
    %190 = vector.multi_reduction <maximumf>, %189, %cst_62 [1] : vector<8x16xf32> to vector<8xf32>
    %191 = vector.shape_cast %190 : vector<8xf32> to vector<8x1xf32>
    %192 = vector.broadcast %191 : vector<8x1xf32> to vector<8x16xf32>
    %193 = arith.subf %189, %192 : vector<8x16xf32>
    %194 = math.exp %193 : vector<8x16xf32>
    %cst_63 = arith.constant dense<0.000000e+00> : vector<8xf32>
    %195 = vector.multi_reduction <add>, %194, %cst_63 [1] : vector<8x16xf32> to vector<8xf32>
    %196 = vector.shape_cast %195 : vector<8xf32> to vector<8x1xf32>
    %197 = tpu.reciprocal %196 {approx = true} : vector<8x1xf32> -> vector<8x1xf32>
    %198 = vector.broadcast %197 : vector<8x1xf32> to vector<8x16xf32>
    %199 = arith.mulf %194, %198 : vector<8x16xf32>
    %200 = vector.extract_strided_slice %140 {offsets = [0, 24], sizes = [16, 8], strides = [1, 1]} : vector<16x32xf32> to vector<16x8xf32>
    %cst_64 = arith.constant dense<0.000000e+00> : vector<8x8xf32>
    %201 = tpu.matmul %199, %200, %cst_64 {dimension_numbers = #tpu.dot_dimension_numbers<[1], [0], [0], [1], [0, 0, 1, 1], [], []>} : vector<8x16xf32>, vector<16x8xf32>, vector<8x8xf32> -> vector<8x8xf32>
    %202 = tpu.concatenate %156, %171, %186, %201 in 1 : vector<8x8xf32>, vector<8x8xf32>, vector<8x8xf32>, vector<8x8xf32> -> vector<8x32xf32>
    %cst_65 = arith.constant dense<0.000000e+00> : vector<8x32xf32>
    %203 = tpu.matmul %202, %66, %cst_65 {dimension_numbers = #tpu.dot_dimension_numbers<[1], [0], [0], [1], [0, 0, 1, 1], [], []>} : vector<8x32xf32>, vector<32x32xf32>, vector<8x32xf32> -> vector<8x32xf32>
    %204 = vector.broadcast %67 : vector<1x32xf32> to vector<8x32xf32>
    %205 = arith.addf %203, %204 : vector<8x32xf32>
    %206 = vector.extract_strided_slice %1 {offsets = [8, 0], sizes = [8, 32], strides = [1, 1]} : vector<16x32xf32> to vector<8x32xf32>
    %207 = arith.addf %205, %206 : vector<8x32xf32>
    %208 = tpu.concatenate %137, %207 in 0 : vector<8x32xf32>, vector<8x32xf32> -> vector<16x32xf32>
    %c7 = arith.constant 7 : index
    %c0_66 = arith.constant 0 : index
    %209 = vector.load %arg3[%c7, %c0_66] : memref<16x128xf32, #tpu.memory_space<vmem>>, vector<1x32xf32>
    %c8 = arith.constant 8 : index
    %c0_67 = arith.constant 0 : index
    %210 = vector.load %arg3[%c8, %c0_67] : memref<16x128xf32, #tpu.memory_space<vmem>>, vector<1x32xf32>
    %cst_68 = arith.constant dense<0.000000e+00> : vector<16xf32>
    %211 = vector.multi_reduction <add>, %208, %cst_68 [1] : vector<16x32xf32> to vector<16xf32>
    %212 = vector.shape_cast %211 : vector<16xf32> to vector<16x1xf32>
    %cst_69 = arith.constant 3.200000e+01 : f32
    %213 = vector.broadcast %cst_69 : f32 to vector<16x1xf32>
    %214 = arith.divf %212, %213 : vector<16x1xf32>
    %215 = arith.mulf %208, %208 : vector<16x32xf32>
    %cst_70 = arith.constant dense<0.000000e+00> : vector<16xf32>
    %216 = vector.multi_reduction <add>, %215, %cst_70 [1] : vector<16x32xf32> to vector<16xf32>
    %217 = vector.shape_cast %216 : vector<16xf32> to vector<16x1xf32>
    %cst_71 = arith.constant 3.200000e+01 : f32
    %218 = vector.broadcast %cst_71 : f32 to vector<16x1xf32>
    %219 = arith.divf %217, %218 : vector<16x1xf32>
    %220 = arith.mulf %214, %214 : vector<16x1xf32>
    %221 = arith.subf %219, %220 : vector<16x1xf32>
    %cst_72 = arith.constant 0.000000e+00 : f32
    %222 = vector.broadcast %cst_72 : f32 to vector<16x1xf32>
    %223 = arith.maximumf %221, %222 : vector<16x1xf32>
    %224 = vector.broadcast %214 : vector<16x1xf32> to vector<16x32xf32>
    %225 = arith.subf %208, %224 : vector<16x32xf32>
    %cst_73 = arith.constant 9.99999974E-6 : f32
    %226 = vector.broadcast %cst_73 : f32 to vector<16x1xf32>
    %227 = arith.addf %223, %226 : vector<16x1xf32>
    %228 = math.rsqrt %227 : vector<16x1xf32>
    %229 = vector.broadcast %228 : vector<16x1xf32> to vector<16x32xf32>
    %230 = arith.mulf %225, %229 : vector<16x32xf32>
    %231 = vector.broadcast %209 : vector<1x32xf32> to vector<16x32xf32>
    %232 = arith.mulf %230, %231 : vector<16x32xf32>
    %233 = vector.broadcast %210 : vector<1x32xf32> to vector<16x32xf32>
    %234 = arith.addf %232, %233 : vector<16x32xf32>
    %c0_74 = arith.constant 0 : index
    %c0_75 = arith.constant 0 : index
    %235 = vector.load %arg7[%c0_74, %c0_75] : memref<32x64xf32, #tpu.memory_space<vmem>>, vector<32x64xf32>
    %cst_76 = arith.constant dense<0.000000e+00> : vector<16x64xf32>
    %236 = tpu.matmul %234, %235, %cst_76 {dimension_numbers = #tpu.dot_dimension_numbers<[1], [0], [0], [1], [0, 0, 1, 1], [], []>} : vector<16x32xf32>, vector<32x64xf32>, vector<16x64xf32> -> vector<16x64xf32>
    %c9 = arith.constant 9 : index
    %c0_77 = arith.constant 0 : index
    %237 = vector.load %arg3[%c9, %c0_77] : memref<16x128xf32, #tpu.memory_space<vmem>>, vector<1x64xf32>
    %238 = vector.broadcast %237 : vector<1x64xf32> to vector<16x64xf32>
    %239 = arith.addf %236, %238 : vector<16x64xf32>
    %cst_78 = arith.constant 5.000000e-01 : f32
    %240 = vector.broadcast %cst_78 : f32 to vector<16x64xf32>
    %241 = arith.mulf %240, %239 : vector<16x64xf32>
    %cst_79 = arith.constant 4.471500e-02 : f32
    %242 = vector.broadcast %cst_79 : f32 to vector<16x64xf32>
    %243 = arith.mulf %242, %239 : vector<16x64xf32>
    %244 = arith.mulf %243, %239 : vector<16x64xf32>
    %245 = arith.mulf %244, %239 : vector<16x64xf32>
    %246 = arith.addf %239, %245 : vector<16x64xf32>
    %cst_80 = arith.constant 0.797884583 : f32
    %247 = vector.broadcast %cst_80 : f32 to vector<16x64xf32>
    %248 = arith.mulf %247, %246 : vector<16x64xf32>
    %249 = math.tanh %248 : vector<16x64xf32>
    %cst_81 = arith.constant 1.000000e+00 : f32
    %250 = vector.broadcast %cst_81 : f32 to vector<16x64xf32>
    %251 = arith.addf %250, %249 : vector<16x64xf32>
    %252 = arith.mulf %241, %251 : vector<16x64xf32>
    %c0_82 = arith.constant 0 : index
    %c0_83 = arith.constant 0 : index
    %253 = vector.load %arg8[%c0_82, %c0_83] : memref<64x32xf32, #tpu.memory_space<vmem>>, vector<64x32xf32>
    %cst_84 = arith.constant dense<0.000000e+00> : vector<16x32xf32>
    %254 = tpu.matmul %252, %253, %cst_84 {dimension_numbers = #tpu.dot_dimension_numbers<[1], [0], [0], [1], [0, 0, 1, 1], [], []>} : vector<16x64xf32>, vector<64x32xf32>, vector<16x32xf32> -> vector<16x32xf32>
    %c10 = arith.constant 10 : index
    %c0_85 = arith.constant 0 : index
    %255 = vector.load %arg3[%c10, %c0_85] : memref<16x128xf32, #tpu.memory_space<vmem>>, vector<1x32xf32>
    %256 = vector.broadcast %255 : vector<1x32xf32> to vector<16x32xf32>
    %257 = arith.addf %254, %256 : vector<16x32xf32>
    %258 = arith.addf %257, %208 : vector<16x32xf32>
    %cst_86 = arith.constant 0.000000e+00 : f32
    %259 = vector.broadcast %cst_86 : f32 to vector<16x64xf32>
    %260 = tpu.concatenate %208, %258, %259 in 1 : vector<16x32xf32>, vector<16x32xf32>, vector<16x64xf32> -> vector<16x128xf32>
    %261 = vector.shape_cast %260 : vector<16x128xf32> to vector<2x8x128xf32>
    %c0_87 = arith.constant 0 : index
    %c0_88 = arith.constant 0 : index
    %c0_89 = arith.constant 0 : index
    %262 = vector.load %arg9[%c0_87, %c0_88, %c0_89] : memref<2x8x128xf32, #tpu.memory_space<vmem>>, vector<2x8x128xf32>
    tpu.vector_store %arg9[%c0_87, %c0_88, %c0_89], %261 {strides = array<i32>} : memref<2x8x128xf32, #tpu.memory_space<vmem>>, vector<2x8x128xf32>,
    return
  }
  func.func @transform_0(%arg0: i32) -> (i32, i32, i32) {
    %c0_i32 = arith.constant 0 : i32
    %c0_i32_0 = arith.constant 0 : i32
    %c0_i32_1 = arith.constant 0 : i32
    return %arg0, %c0_i32, %c0_i32_0 : i32, i32, i32
  }
  func.func @transform_1(%arg0: i32) -> (i32, i32, i32) {
    %c0_i32 = arith.constant 0 : i32
    %c0_i32_0 = arith.constant 0 : i32
    %c0_i32_1 = arith.constant 0 : i32
    return %arg0, %c0_i32, %c0_i32_0 : i32, i32, i32
  }
  func.func @transform_2(%arg0: i32) -> (i32, i32) {
    %c0_i32 = arith.constant 0 : i32
    %c0_i32_0 = arith.constant 0 : i32
    %c0_i32_1 = arith.constant 0 : i32
    return %c0_i32, %c0_i32_0 : i32, i32
  }
  func.func @transform_3(%arg0: i32) -> (i32, i32) {
    %c0_i32 = arith.constant 0 : i32
    %c0_i32_0 = arith.constant 0 : i32
    %c0_i32_1 = arith.constant 0 : i32
    return %c0_i32, %c0_i32_0 : i32, i32
  }
  func.func @transform_4(%arg0: i32) -> (i32, i32) {
    %c0_i32 = arith.constant 0 : i32
    %c0_i32_0 = arith.constant 0 : i32
    %c0_i32_1 = arith.constant 0 : i32
    return %c0_i32, %c0_i32_0 : i32, i32
  }
  func.func @transform_5(%arg0: i32) -> (i32, i32) {
    %c0_i32 = arith.constant 0 : i32
    %c0_i32_0 = arith.constant 0 : i32
    %c0_i32_1 = arith.constant 0 : i32
    return %c0_i32, %c0_i32_0 : i32, i32
  }
  func.func @transform_6(%arg0: i32) -> (i32, i32) {
    %c0_i32 = arith.constant 0 : i32
    %c0_i32_0 = arith.constant 0 : i32
    %c0_i32_1 = arith.constant 0 : i32
    return %c0_i32, %c0_i32_0 : i32, i32
  }
  func.func @transform_7(%arg0: i32) -> (i32, i32) {
    %c0_i32 = arith.constant 0 : i32
    %c0_i32_0 = arith.constant 0 : i32
    %c0_i32_1 = arith.constant 0 : i32
    return %c0_i32, %c0_i32_0 : i32, i32
  }
  func.func @transform_8(%arg0: i32) -> (i32, i32, i32) {
    %c0_i32 = arith.constant 0 : i32
    %c0_i32_0 = arith.constant 0 : i32
    %c0_i32_1 = arith.constant 0 : i32
    return %arg0, %c0_i32, %c0_i32_0 : i32, i32, i32
  }
}

</mosaic_0001>

<llo_original>
// kernel: tpu_custom_call.1
$region0: #{tpu_custom_call.1}
  #allocation0 [shape = 'u32[]', space=smem, size = 0x4, offset = 0x4, fixed_abs, tag = 'smem constant byte address 0x4 - core index']
  #allocation1 [shape = 'u32[144,128]{1,0:T(1,128)}', space=vmem, size = 0x12000, scoped, tag = 'internal scratch']
  %s0 = inlined_call_operand.hbm [shape: f32[2,8,32], index: 0, kind: input, shape index: {}]
  %s1 = inlined_call_operand.vmem [shape: f32[2,16,16], index: 1, kind: input, shape index: {}]
  %s2 = inlined_call_operand.hbm [shape: f32[16,128], index: 2, kind: input, shape index: {}]
  %s3 = inlined_call_operand.vmem [shape: f32[32,32], index: 3, kind: input, shape index: {}]
  %s4 = inlined_call_operand.hbm [shape: f32[16,64], index: 4, kind: input, shape index: {}]
  %s5 = inlined_call_operand.vmem [shape: f32[32,32], index: 5, kind: input, shape index: {}]
  %s6 = inlined_call_operand.hbm [shape: f32[32,64], index: 6, kind: input, shape index: {}]
  %s7 = inlined_call_operand.vmem [shape: f32[64,32], index: 7, kind: input, shape index: {}]
  %s8 = inlined_call_operand.hbm [shape: f32[2,8,128], index: 8, kind: output, shape index: {}]
  %s9 = sld [smem:[#allocation0]]
  $region58: #{tpu_custom_call.1} parent=0
    _
  %s11 = ssub.s32 1, %s9
  %s12 = scalar_select 0, %s11, %s9
  $region1: #{tpu_custom_call.1} parent=0
    #allocation2 [shape = 'u8[8192]{0}', space=vmem, size = 0x2000, scoped, tag = 'input window, operand 0, single buffered']
    #allocation3 [shape = 's32[1]{0}', space=sflag, size = 0x4, scoped, tag = 'scoped memory for tpu_custom_call.1']
    #allocation4 [shape = 's32[1]{0}', space=sflag, size = 0x4, scoped, tag = 'scoped memory for tpu_custom_call.1']
    #allocation5 [shape = 'u8[8192]{0}', space=vmem, size = 0x2000, scoped, tag = 'input window, operand 2, single buffered']
    #allocation6 [shape = 's32[1]{0}', space=sflag, size = 0x4, scoped, tag = 'scoped memory for tpu_custom_call.1']
    #allocation7 [shape = 'u8[8192]{0}', space=vmem, size = 0x2000, scoped, tag = 'input window, operand 4, single buffered']
    #allocation8 [shape = 'u8[16384]{0}', space=vmem, size = 0x4000, scoped, tag = 'input window, operand 6, single buffered']
    #allocation9 [shape = 's32[1]{0}', space=sflag, size = 0x4, scoped, tag = 'scoped memory for tpu_custom_call.1']
    #allocation10 [shape = 'u8[8192]{0}', space=vmem, size = 0x2000, scoped, tag = 'output window, operand 0, single buffered']
    %13 = vsyncpa [#allocation3], 0
    %14 = vsyncpa [#allocation6], 0
    %15 = vsyncpa [#allocation9], 0
    %16 = vsyncpa [#allocation4], 0
    // Predicated region
    $region2: #{tpu_custom_call.1} parent=1 // pred_check
      _
    $region3: #{tpu_custom_call.1} parent=1 // pred_check_branch
      %18 = sbr.rel (0) target = $region5
    $region4: #{tpu_custom_call.1} parent=1 // pred_region
      %s20 = ssub.s32 256, 256
      %21 = vsyncadd [#allocation3], %s20
      %s22 = sshll.u32 [#allocation2], 4
      %s23 = int_to_ptr.vmem [resolvable:$true] %s22
      %28 = dma.hbm_to_vmem [thread:$0]  %s0, 256, %s23, [#allocation3], 128, 128, 8
    $region5: #{tpu_custom_call.1} parent=1 // pred_fallthru
      _
    // Predicated region
    $region6: #{tpu_custom_call.1} parent=1 // pred_check
      _
    $region7: #{tpu_custom_call.1} parent=1 // pred_check_branch
      %30 = sbr.rel (0) target = $region9
    $region8: #{tpu_custom_call.1} parent=1 // pred_region
      _
    $region9: #{tpu_custom_call.1} parent=1 // pred_fallthru
      _
    // Predicated region
    $region10: #{tpu_custom_call.1} parent=1 // pred_check
      _
    $region11: #{tpu_custom_call.1} parent=1 // pred_check_branch
      %32 = sbr.rel (0) target = $region13
    $region12: #{tpu_custom_call.1} parent=1 // pred_region
      %s34 = ssub.s32 256, 256
      %35 = vsyncadd [#allocation6], %s34
      %s36 = sshll.u32 [#allocation5], 4
      %s37 = int_to_ptr.vmem [resolvable:$true] %s36
      %42 = dma.hbm_to_vmem [thread:$0]  %s2, 256, %s37, [#allocation6], 128, 128, 8
    $region13: #{tpu_custom_call.1} parent=1 // pred_fallthru
      _
    // Predicated region
    $region14: #{tpu_custom_call.1} parent=1 // pred_check
      _
    $region15: #{tpu_custom_call.1} parent=1 // pred_check_branch
      %44 = sbr.rel (0) target = $region17
    $region16: #{tpu_custom_call.1} parent=1 // pred_region
      _
    $region17: #{tpu_custom_call.1} parent=1 // pred_fallthru
      _
    // Predicated region
    $region18: #{tpu_custom_call.1} parent=1 // pred_check
      _
    $region19: #{tpu_custom_call.1} parent=1 // pred_check_branch
      %46 = sbr.rel (0) target = $region21
    $region20: #{tpu_custom_call.1} parent=1 // pred_region
      %s48 = ssub.s32 256, 256
      %49 = vsyncadd [#allocation6], %s48
      %s50 = sshll.u32 [#allocation7], 4
      %s51 = int_to_ptr.vmem [resolvable:$true] %s50
      %56 = dma.hbm_to_vmem [thread:$0]  %s4, 256, %s51, [#allocation6], 128, 128, 8
    $region21: #{tpu_custom_call.1} parent=1 // pred_fallthru
      _
    // Predicated region
    $region22: #{tpu_custom_call.1} parent=1 // pred_check
      _
    $region23: #{tpu_custom_call.1} parent=1 // pred_check_branch
      %58 = sbr.rel (0) target = $region25
    $region24: #{tpu_custom_call.1} parent=1 // pred_region
      _
    $region25: #{tpu_custom_call.1} parent=1 // pred_fallthru
      _
    // Predicated region
    $region26: #{tpu_custom_call.1} parent=1 // pred_check
      _
    $region27: #{tpu_custom_call.1} parent=1 // pred_check_branch
      %60 = sbr.rel (0) target = $region29
    $region28: #{tpu_custom_call.1} parent=1 // pred_region
      %s62 = ssub.s32 512, 512
      %63 = vsyncadd [#allocation9], %s62
      %s64 = sshll.u32 [#allocation8], 4
      %s65 = int_to_ptr.vmem [resolvable:$true] %s64
      %70 = dma.hbm_to_vmem [thread:$0]  %s6, 512, %s65, [#allocation9], 128, 128, 8
    $region29: #{tpu_custom_call.1} parent=1 // pred_fallthru
      _
    // Predicated region
    $region30: #{tpu_custom_call.1} parent=1 // pred_check
      _
    $region31: #{tpu_custom_call.1} parent=1 // pred_check_branch
      %72 = sbr.rel (0) target = $region33
    $region32: #{tpu_custom_call.1} parent=1 // pred_region
      _
    $region33: #{tpu_custom_call.1} parent=1 // pred_fallthru
      _
    // Predicated region
    $region34: #{tpu_custom_call.1} parent=1 // pred_check
      _
    $region35: #{tpu_custom_call.1} parent=1 // pred_check_branch
      %74 = sbr.rel (0) target = $region37
    $region36: #{tpu_custom_call.1} parent=1 // pred_region
      %75 = dma.done [#allocation3], 256
    $region37: #{tpu_custom_call.1} parent=1 // pred_fallthru
      _
    // Predicated region
    $region38: #{tpu_custom_call.1} parent=1 // pred_check
      _
    $region39: #{tpu_custom_call.1} parent=1 // pred_check_branch
      %77 = sbr.rel (0) target = $region41
    $region40: #{tpu_custom_call.1} parent=1 // pred_region
      %78 = dma.done [#allocation6], 256
    $region41: #{tpu_custom_call.1} parent=1 // pred_fallthru
      _
    // Predicated region
    $region42: #{tpu_custom_call.1} parent=1 // pred_check
      _
    $region43: #{tpu_custom_call.1} parent=1 // pred_check_branch
      %80 = sbr.rel (0) target = $region45
    $region44: #{tpu_custom_call.1} parent=1 // pred_region
      %81 = dma.done [#allocation6], 256
    $region45: #{tpu_custom_call.1} parent=1 // pred_fallthru
      _
    // Predicated region
    $region46: #{tpu_custom_call.1} parent=1 // pred_check
      _
    $region47: #{tpu_custom_call.1} parent=1 // pred_check_branch
      %83 = sbr.rel (0) target = $region49
    $region48: #{tpu_custom_call.1} parent=1 // pred_region
      %84 = dma.done [#allocation9], 512
    $region49: #{tpu_custom_call.1} parent=1 // pred_fallthru
      _
    %v85 = vld [vmem:[#allocation2] sm:$0xff]
    %v86 = vld [vmem:[#allocation2 + $0x8] sm:$0xff]
    %v87 = vld [vmem:[%s1] sm:$0xff]
    %v88 = vld [vmem:[%s1 + $0x8] sm:$0xff]
    %v89 = vld [vmem:[%s1 + $0x10] sm:$0xff]
    %v90 = vld [vmem:[%s1 + $0x18] sm:$0xff]
    %v91 = vld [vmem:[#allocation5] sm:$0x1]
    %v92 = vld [vmem:[#allocation5 + $0x1] sm:$0x1]
    %vm93 = vcmask 261120
    %v94 = vsel %vm93, %v85, 0.0
    %95 = vadd.xlane.f32.xlu0 %v94
    %v96 = vpop.xlane.xlu0 %95
    %v97 = vsel %vm93, %v86, 0.0
    %98 = vadd.xlane.f32.xlu0 %v97
    %v99 = vpop.xlane.xlu0 %98
    %v100 = vrcp.pop 32.0
    %v101 = vmul.f32 %v96, %v100
    %v102 = vmul.f32 %v99, %v100
    %v103 = vmul.f32 %v85, %v85
    %v104 = vmul.f32 %v86, %v86
    %v105 = vsel %vm93, %v103, 0.0
    %106 = vadd.xlane.f32.xlu0 %v105
    %v107 = vpop.xlane.xlu0 %106
    %v108 = vsel %vm93, %v104, 0.0
    %109 = vadd.xlane.f32.xlu0 %v108
    %v110 = vpop.xlane.xlu0 %109
    %v111 = vmul.f32 %v107, %v100
    %v112 = vmul.f32 %v110, %v100
    %v113 = vmul.f32 %v101, %v101
    %v114 = vmul.f32 %v102, %v102
    %v115 = vsub.f32 %v111, %v113
    %v116 = vsub.f32 %v112, %v114
    %v117 = vmax.f32 %v115, 0.0
    %v118 = vmax.f32 %v116, 0.0
    %v119 = vsub.f32 %v85, %v101
    %v120 = vsub.f32 %v86, %v102
    %v121 = vadd.f32 %v117, 1e-05
    %v122 = vadd.f32 %v118, 1e-05
    %v123 = vrsqrt.pop %v121
    %v124 = vrsqrt.pop %v122
    %v125 = vmul.f32 %v119, %v123
    %v126 = vmul.f32 %v120, %v124
    %v127 = vlaneseq
    %v128 = vshrl.u32 %v127, 7
    %v129 = vsub.s32 0, %v128
    %v130 = vrot.slane %v91, %v129
    %v131 = vmul.f32 %v125, %v130
    %v132 = vmul.f32 %v126, %v130
    %v133 = vlaneseq
    %v134 = vshrl.u32 %v133, 7
    %v135 = vsub.s32 0, %v134
    %v136 = vrot.slane %v92, %v135
    %v137 = vadd.f32 %v131, %v136
    %v138 = vadd.f32 %v132, %v136
    %v139 = vld [vmem:[#allocation5 + $0x2] sm:$0x1]
    %v140 = vld [vmem:[#allocation5 + $0x3] sm:$0x1]
    %vm141 = vcmask 130048
    %v142 = vsel %vm141, %v87, 0.0
    %143 = vadd.xlane.f32.xlu0 %v142
    %v144 = vpop.xlane.xlu0 %143
    %v145 = vsel %vm141, %v88, 0.0
    %146 = vadd.xlane.f32.xlu0 %v145
    %v147 = vpop.xlane.xlu0 %146
    %v148 = vsel %vm141, %v89, 0.0
    %149 = vadd.xlane.f32.xlu0 %v148
    %v150 = vpop.xlane.xlu0 %149
    %v151 = vsel %vm141, %v90, 0.0
    %152 = vadd.xlane.f32.xlu0 %v151
    %v153 = vpop.xlane.xlu0 %152
    %v154 = vrcp.pop 16.0
    %v155 = vmul.f32 %v144, %v154
    %v156 = vmul.f32 %v147, %v154
    %v157 = vmul.f32 %v150, %v154
    %v158 = vmul.f32 %v153, %v154
    %v159 = vmul.f32 %v87, %v87
    %v160 = vmul.f32 %v88, %v88
    %v161 = vmul.f32 %v89, %v89
    %v162 = vmul.f32 %v90, %v90
    %v163 = vsel %vm141, %v159, 0.0
    %164 = vadd.xlane.f32.xlu0 %v163
    %v165 = vpop.xlane.xlu0 %164
    %v166 = vsel %vm141, %v160, 0.0
    %167 = vadd.xlane.f32.xlu0 %v166
    %v168 = vpop.xlane.xlu0 %167
    %v169 = vsel %vm141, %v161, 0.0
    %170 = vadd.xlane.f32.xlu0 %v169
    %v171 = vpop.xlane.xlu0 %170
    %v172 = vsel %vm141, %v162, 0.0
    %173 = vadd.xlane.f32.xlu0 %v172
    %v174 = vpop.xlane.xlu0 %173
    %v175 = vmul.f32 %v165, %v154
    %v176 = vmul.f32 %v168, %v154
    %v177 = vmul.f32 %v171, %v154
    %v178 = vmul.f32 %v174, %v154
    %v179 = vmul.f32 %v155, %v155
    %v180 = vmul.f32 %v156, %v156
    %v181 = vmul.f32 %v157, %v157
    %v182 = vmul.f32 %v158, %v158
    %v183 = vsub.f32 %v175, %v179
    %v184 = vsub.f32 %v176, %v180
    %v185 = vsub.f32 %v177, %v181
    %v186 = vsub.f32 %v178, %v182
    %v187 = vmax.f32 %v183, 0.0
    %v188 = vmax.f32 %v184, 0.0
    %v189 = vmax.f32 %v185, 0.0
    %v190 = vmax.f32 %v186, 0.0
    %v191 = vsub.f32 %v87, %v155
    %v192 = vsub.f32 %v88, %v156
    %v193 = vsub.f32 %v89, %v157
    %v194 = vsub.f32 %v90, %v158
    %v195 = vadd.f32 %v187, 1e-05
    %v196 = vadd.f32 %v188, 1e-05
    %v197 = vadd.f32 %v189, 1e-05
    %v198 = vadd.f32 %v190, 1e-05
    %v199 = vrsqrt.pop %v195
    %v200 = vrsqrt.pop %v196
    %v201 = vrsqrt.pop %v197
    %v202 = vrsqrt.pop %v198
    %v203 = vmul.f32 %v191, %v199
    %v204 = vmul.f32 %v192, %v200
    %v205 = vmul.f32 %v193, %v201
    %v206 = vmul.f32 %v194, %v202
    %v207 = vlaneseq
    %v208 = vshrl.u32 %v207, 7
    %v209 = vsub.s32 0, %v208
    %v210 = vrot.slane %v139, %v209
    %v211 = vmul.f32 %v203, %v210
    %v212 = vmul.f32 %v204, %v210
    %v213 = vmul.f32 %v205, %v210
    %v214 = vmul.f32 %v206, %v210
    %v215 = vlaneseq
    %v216 = vshrl.u32 %v215, 7
    %v217 = vsub.s32 0, %v216
    %v218 = vrot.slane %v140, %v217
    %v219 = vadd.f32 %v211, %v218
    %v220 = vadd.f32 %v212, %v218
    %v221 = vadd.f32 %v213, %v218
    %v222 = vadd.f32 %v214, %v218
    %v223 = vld [vmem:[%s3] sm:$0xff]
    %v224 = vld [vmem:[%s3 + $0x8] sm:$0xff]
    %v225 = vld [vmem:[%s3 + $0x10] sm:$0xff]
    %v226 = vld [vmem:[%s3 + $0x18] sm:$0xff]
    %v227 = vld [vmem:[#allocation5 + $0x4] sm:$0x1]
    %v228 = vlaneseq
    %v229 = vshrl.u32 %v228, 7
    %v230 = vsub.s32 0, %v229
    %v231 = vrot.slane %v227, %v230
    %v233 = vsel %vm93, %v137, 0
    %v236 = vsel %vm93, %v138, 0
    %238 = vmatprep.subr.mxu0 0.0
    %239 = vmatpush1.msra.mxu0 %v223
    %240 = vmatprep.subr.mxu0 0.0
    %241 = vmatpush1.msra.mxu0 %v224
    %242 = vmatprep.subr.mxu0 0.0
    %243 = vmatpush1.msra.mxu0 %v225
    %244 = vmatprep.subr.mxu0 0.0
    %245 = vmatpush1.msra.mxu0 %v226
    %246 = vmatprep.subr.mxu0 0.0
    %247 = vmatpush1.msra.mxu0 0.0
    %248 = vmatprep.subr.mxu0 0.0
    %249 = vmatpush1.msra.mxu0 0.0
    %250 = vmatprep.subr.mxu0 0.0
    %251 = vmatpush1.msra.mxu0 0.0
    %252 = vmatprep.subr.mxu0 0.0
    %253 = vmatpush1.msra.mxu0 0.0
    %254 = vmatprep.subr.mxu0 0.0
    %255 = vmatpush1.msra.mxu0 0.0
    %256 = vmatprep.subr.mxu0 0.0
    %257 = vmatpush1.msra.mxu0 0.0
    %258 = vmatprep.subr.mxu0 0.0
    %259 = vmatpush1.msra.mxu0 0.0
    %260 = vmatprep.subr.mxu0 0.0
    %261 = vmatpush1.msra.mxu0 0.0
    %262 = vmatprep.subr.mxu0 0.0
    %263 = vmatpush1.msra.mxu0 0.0
    %264 = vmatprep.subr.mxu0 0.0
    %265 = vmatpush1.msra.mxu0 0.0
    %266 = vmatprep.subr.mxu0 0.0
    %267 = vmatpush1.msra.mxu0 0.0
    %268 = vmatprep.subr.mxu0 0.0
    %269 = vmatpush1.msra.mxu0 0.0
    %270 = vmatprep.subr.mxu0 0.0
    %271 = vmatpush1.msra.mxu0 0.0
    %272 = vmatprep.subr.mxu0 0.0
    %273 = vmatpush1.msra.mxu0 0.0
    %274 = vmatprep.subr.mxu0 0.0
    %275 = vmatpush1.msra.mxu0 0.0
    %276 = vmatprep.subr.mxu0 0.0
    %277 = vmatpush1.msra.mxu0 0.0
    %278 = vmatprep.subr.mxu0 0.0
    %279 = vmatpush1.msra.mxu0 0.0
    %280 = vmatprep.subr.mxu0 0.0
    %281 = vmatpush1.msra.mxu0 0.0
    %282 = vmatprep.subr.mxu0 0.0
    %283 = vmatpush1.msra.mxu0 0.0
    %284 = vmatprep.subr.mxu0 0.0
    %285 = vmatpush1.msra.mxu0 0.0
    %286 = vmatprep.subr.mxu0 0.0
    %287 = vmatpush1.msra.mxu0 0.0
    %288 = vmatprep.subr.mxu0 0.0
    %289 = vmatpush1.msra.mxu0 0.0
    %290 = vmatprep.subr.mxu0 0.0
    %291 = vmatpush1.msra.mxu0 0.0
    %292 = vmatprep.subr.mxu0 0.0
    %293 = vmatpush1.msra.mxu0 0.0
    %294 = vmatprep.subr.mxu0 0.0
    %295 = vmatpush1.msra.mxu0 0.0
    %296 = vmatprep.subr.mxu0 0.0
    %297 = vmatpush1.msra.mxu0 0.0
    %298 = vmatprep.subr.mxu0 0.0
    %299 = vmatpush1.msra.mxu0 0.0
    %300 = vmatprep.subr.mxu0 0.0
    %301 = vmatpush1.msra.mxu0 0.0
    %302 = vmatprep.mubr.f32.mxu0 0.0
    %303 = vmatmul.mubr.f32.gmra.mrb[0].mxu0 %v233
    %v304 = vpop.f32.mrb[0].mxu0
    %v305 = vadd.f32 %v231, %v304
    %v306 = vpop.f32.mrb[0].mxu0
    %307 = vmatprep.mubr.f32.mxu0 0.0
    %308 = vmatmul.mubr.f32.gmra.mrb[0].mxu0 %v236
    %v309 = vpop.f32.mrb[0].mxu0
    %v310 = vadd.f32 %v231, %v309
    %v311 = vpop.f32.mrb[0].mxu0
    %312 = vdwg.mxu0
    %v313 = vld [vmem:[#allocation7] sm:$0xff]
    %v314 = vld [vmem:[#allocation7 + $0x8] sm:$0xff]
    %v315 = vld [vmem:[#allocation5 + $0x5] sm:$0x1]
    %v316 = vlaneseq
    %v317 = vshrl.u32 %v316, 7
    %v318 = vsub.s32 0, %v317
    %v319 = vrot.slane %v315, %v318
    %v321 = vsel %vm141, %v219, 0
    %v324 = vsel %vm141, %v220, 0
    %v327 = vsel %vm141, %v221, 0
    %v330 = vsel %vm141, %v222, 0
    %332 = vmatprep.subr.mxu0 0.0
    %333 = vmatpush1.msra.mxu0 %v313
    %334 = vmatprep.subr.mxu0 0.0
    %335 = vmatpush1.msra.mxu0 %v314
    %336 = vmatprep.subr.mxu0 0.0
    %337 = vmatpush1.msra.mxu0 0.0
    %338 = vmatprep.subr.mxu0 0.0
    %339 = vmatpush1.msra.mxu0 0.0
    %340 = vmatprep.subr.mxu0 0.0
    %341 = vmatpush1.msra.mxu0 0.0
    %342 = vmatprep.subr.mxu0 0.0
    %343 = vmatpush1.msra.mxu0 0.0
    %344 = vmatprep.subr.mxu0 0.0
    %345 = vmatpush1.msra.mxu0 0.0
    %346 = vmatprep.subr.mxu0 0.0
    %347 = vmatpush1.msra.mxu0 0.0
    %348 = vmatprep.subr.mxu0 0.0
    %349 = vmatpush1.msra.mxu0 0.0
    %350 = vmatprep.subr.mxu0 0.0
    %351 = vmatpush1.msra.mxu0 0.0
    %352 = vmatprep.subr.mxu0 0.0
    %353 = vmatpush1.msra.mxu0 0.0
    %354 = vmatprep.subr.mxu0 0.0
    %355 = vmatpush1.msra.mxu0 0.0
    %356 = vmatprep.subr.mxu0 0.0
    %357 = vmatpush1.msra.mxu0 0.0
    %358 = vmatprep.subr.mxu0 0.0
    %359 = vmatpush1.msra.mxu0 0.0
    %360 = vmatprep.subr.mxu0 0.0
    %361 = vmatpush1.msra.mxu0 0.0
    %362 = vmatprep.subr.mxu0 0.0
    %363 = vmatpush1.msra.mxu0 0.0
    %364 = vmatprep.subr.mxu0 0.0
    %365 = vmatpush1.msra.mxu0 0.0
    %366 = vmatprep.subr.mxu0 0.0
    %367 = vmatpush1.msra.mxu0 0.0
    %368 = vmatprep.subr.mxu0 0.0
    %369 = vmatpush1.msra.mxu0 0.0
    %370 = vmatprep.subr.mxu0 0.0
    %371 = vmatpush1.msra.mxu0 0.0
    %372 = vmatprep.subr.mxu0 0.0
    %373 = vmatpush1.msra.mxu0 0.0
    %374 = vmatprep.subr.mxu0 0.0
    %375 = vmatpush1.msra.mxu0 0.0
    %376 = vmatprep.subr.mxu0 0.0
    %377 = vmatpush1.msra.mxu0 0.0
    %378 = vmatprep.subr.mxu0 0.0
    %379 = vmatpush1.msra.mxu0 0.0
    %380 = vmatprep.subr.mxu0 0.0
    %381 = vmatpush1.msra.mxu0 0.0
    %382 = vmatprep.subr.mxu0 0.0
    %383 = vmatpush1.msra.mxu0 0.0
    %384 = vmatprep.subr.mxu0 0.0
    %385 = vmatpush1.msra.mxu0 0.0
    %386 = vmatprep.subr.mxu0 0.0
    %387 = vmatpush1.msra.mxu0 0.0
    %388 = vmatprep.subr.mxu0 0.0
    %389 = vmatpush1.msra.mxu0 0.0
    %390 = vmatprep.subr.mxu0 0.0
    %391 = vmatpush1.msra.mxu0 0.0
    %392 = vmatprep.subr.mxu0 0.0
    %393 = vmatpush1.msra.mxu0 0.0
    %394 = vmatprep.subr.mxu0 0.0
    %395 = vmatpush1.msra.mxu0 0.0
    %396 = vmatprep.mubr.f32.mxu0 0.0
    %397 = vmatmul.mubr.f32.gmra.mrb[0].mxu0 %v321
    %v398 = vpop.f32.mrb[0].mxu0
    %v399 = vadd.f32 %v319, %v398
    %v400 = vpop.f32.mrb[0].mxu0
    %401 = vmatprep.mubr.f32.mxu0 0.0
    %402 = vmatmul.mubr.f32.gmra.mrb[0].mxu0 %v324
    %v403 = vpop.f32.mrb[0].mxu0
    %v404 = vadd.f32 %v319, %v403
    %v405 = vpop.f32.mrb[0].mxu0
    %406 = vmatprep.mubr.f32.mxu0 0.0
    %407 = vmatmul.mubr.f32.gmra.mrb[0].mxu0 %v327
    %v408 = vpop.f32.mrb[0].mxu0
    %v409 = vadd.f32 %v319, %v408
    %v410 = vpop.f32.mrb[0].mxu0
    %411 = vmatprep.mubr.f32.mxu0 0.0
    %412 = vmatmul.mubr.f32.gmra.mrb[0].mxu0 %v330
    %v413 = vpop.f32.mrb[0].mxu0
    %v414 = vadd.f32 %v319, %v413
    %v415 = vpop.f32.mrb[0].mxu0
    %416 = vdwg.mxu0
    %v417 = vld [vmem:[%s5] sm:$0xff]
    %v418 = vld [vmem:[%s5 + $0x8] sm:$0xff]
    %v419 = vld [vmem:[%s5 + $0x10] sm:$0xff]
    %v420 = vld [vmem:[%s5 + $0x18] sm:$0xff]
    %v421 = vld [vmem:[#allocation5 + $0x6] sm:$0x1]
    %vm422 = vcmask 64512
    %v424 = vsel %vm422, %v305, 0
    %v427 = vsel %vm422, %v399, 0
    %v430 = vsel %vm422, %v404, 0
    %432 = vmatprep.subr.mxu0 0.0
    %433 = vmatpush1.xpose.msra.mxu0 %v427
    %434 = vmatprep.subr.mxu0 0.0
    %435 = vmatpush1.xpose.msra.mxu0 %v430
    %436 = vmatprep.subr.mxu0 0.0
    %437 = vmatpush1.xpose.msra.mxu0 0.0
    %438 = vmatprep.subr.mxu0 0.0
    %439 = vmatpush1.xpose.msra.mxu0 0.0
    %440 = vmatprep.subr.mxu0 0.0
    %441 = vmatpush1.xpose.msra.mxu0 0.0
    %442 = vmatprep.subr.mxu0 0.0
    %443 = vmatpush1.xpose.msra.mxu0 0.0
    %444 = vmatprep.subr.mxu0 0.0
    %445 = vmatpush1.xpose.msra.mxu0 0.0
    %446 = vmatprep.subr.mxu0 0.0
    %447 = vmatpush1.xpose.msra.mxu0 0.0
    %448 = vmatprep.subr.mxu0 0.0
    %449 = vmatpush1.xpose.msra.mxu0 0.0
    %450 = vmatprep.subr.mxu0 0.0
    %451 = vmatpush1.xpose.msra.mxu0 0.0
    %452 = vmatprep.subr.mxu0 0.0
    %453 = vmatpush1.xpose.msra.mxu0 0.0
    %454 = vmatprep.subr.mxu0 0.0
    %455 = vmatpush1.xpose.msra.mxu0 0.0
    %456 = vmatprep.subr.mxu0 0.0
    %457 = vmatpush1.xpose.msra.mxu0 0.0
    %458 = vmatprep.subr.mxu0 0.0
    %459 = vmatpush1.xpose.msra.mxu0 0.0
    %460 = vmatprep.subr.mxu0 0.0
    %461 = vmatpush1.xpose.msra.mxu0 0.0
    %462 = vmatprep.subr.mxu0 0.0
    %463 = vmatpush1.xpose.msra.mxu0 0.0
    %464 = vmatprep.subr.mxu0 0.0
    %465 = vmatpush1.xpose.msra.mxu0 0.0
    %466 = vmatprep.subr.mxu0 0.0
    %467 = vmatpush1.xpose.msra.mxu0 0.0
    %468 = vmatprep.subr.mxu0 0.0
    %469 = vmatpush1.xpose.msra.mxu0 0.0
    %470 = vmatprep.subr.mxu0 0.0
    %471 = vmatpush1.xpose.msra.mxu0 0.0
    %472 = vmatprep.subr.mxu0 0.0
    %473 = vmatpush1.xpose.msra.mxu0 0.0
    %474 = vmatprep.subr.mxu0 0.0
    %475 = vmatpush1.xpose.msra.mxu0 0.0
    %476 = vmatprep.subr.mxu0 0.0
    %477 = vmatpush1.xpose.msra.mxu0 0.0
    %478 = vmatprep.subr.mxu0 0.0
    %479 = vmatpush1.xpose.msra.mxu0 0.0
    %480 = vmatprep.subr.mxu0 0.0
    %481 = vmatpush1.xpose.msra.mxu0 0.0
    %482 = vmatprep.subr.mxu0 0.0
    %483 = vmatpush1.xpose.msra.mxu0 0.0
    %484 = vmatprep.subr.mxu0 0.0
    %485 = vmatpush1.xpose.msra.mxu0 0.0
    %486 = vmatprep.subr.mxu0 0.0
    %487 = vmatpush1.xpose.msra.mxu0 0.0
    %488 = vmatprep.subr.mxu0 0.0
    %489 = vmatpush1.xpose.msra.mxu0 0.0
    %490 = vmatprep.subr.mxu0 0.0
    %491 = vmatpush1.xpose.msra.mxu0 0.0
    %492 = vmatprep.subr.mxu0 0.0
    %493 = vmatpush1.xpose.msra.mxu0 0.0
    %494 = vmatprep.subr.mxu0 0.0
    %495 = vmatpush1.xpose.msra.mxu0 0.0
    %496 = vmatprep.mubr.f32.mxu0 0.0
    %497 = vmatmul.mubr.f32.gmra.mrb[0].mxu0 %v424
    %v498 = vpop.f32.mrb[0].mxu0
    %v499 = vadd.f32 0.0, %v498
    %v500 = vpop.f32.mrb[0].mxu0
    %501 = vdwg.mxu0
    %v502 = vsel %vm141, %v499, -inf
    %503 = vmax.xlane.f32.xlu0 %v502
    %v504 = vpop.xlane.xlu0 %503
    %v505 = vsub.f32 %v499, %v504
    %v506 = vmul.f32 %v505, 1.442695
    %v507 = vpow.pop %v506
    %v508 = vsel %vm141, %v507, 0.0
    %509 = vadd.xlane.f32.xlu0 %v508
    %v510 = vpop.xlane.xlu0 %509
    %v511 = vrcp.pop %v510
    %v512 = vmul.f32 %v507, %v511
    %513 = vrot.lane.b32.xlu0 %v399, 96
    %v514 = vpop.permute.xlu0 %513
    %515 = vrot.lane.b32.xlu0 %v404, 96
    %v516 = vpop.permute.xlu0 %515
    %v520 = vsel %vm141, %v512, 0
    %522 = vmatprep.subr.mxu0 0.0
    %523 = vmatpush1.msra.mxu0 %v514
    %524 = vmatprep.subr.mxu0 0.0
    %525 = vmatpush1.msra.mxu0 %v516
    %526 = vmatprep.subr.mxu0 0.0
    %527 = vmatpush1.msra.mxu0 0.0
    %528 = vmatprep.subr.mxu0 0.0
    %529 = vmatpush1.msra.mxu0 0.0
    %530 = vmatprep.subr.mxu0 0.0
    %531 = vmatpush1.msra.mxu0 0.0
    %532 = vmatprep.subr.mxu0 0.0
    %533 = vmatpush1.msra.mxu0 0.0
    %534 = vmatprep.subr.mxu0 0.0
    %535 = vmatpush1.msra.mxu0 0.0
    %536 = vmatprep.subr.mxu0 0.0
    %537 = vmatpush1.msra.mxu0 0.0
    %538 = vmatprep.subr.mxu0 0.0
    %539 = vmatpush1.msra.mxu0 0.0
    %540 = vmatprep.subr.mxu0 0.0
    %541 = vmatpush1.msra.mxu0 0.0
    %542 = vmatprep.subr.mxu0 0.0
    %543 = vmatpush1.msra.mxu0 0.0
    %544 = vmatprep.subr.mxu0 0.0
    %545 = vmatpush1.msra.mxu0 0.0
    %546 = vmatprep.subr.mxu0 0.0
    %547 = vmatpush1.msra.mxu0 0.0
    %548 = vmatprep.subr.mxu0 0.0
    %549 = vmatpush1.msra.mxu0 0.0
    %550 = vmatprep.subr.mxu0 0.0
    %551 = vmatpush1.msra.mxu0 0.0
    %552 = vmatprep.subr.mxu0 0.0
    %553 = vmatpush1.msra.mxu0 0.0
    %554 = vmatprep.subr.mxu0 0.0
    %555 = vmatpush1.msra.mxu0 0.0
    %556 = vmatprep.subr.mxu0 0.0
    %557 = vmatpush1.msra.mxu0 0.0
    %558 = vmatprep.subr.mxu0 0.0
    %559 = vmatpush1.msra.mxu0 0.0
    %560 = vmatprep.subr.mxu0 0.0
    %561 = vmatpush1.msra.mxu0 0.0
    %562 = vmatprep.subr.mxu0 0.0
    %563 = vmatpush1.msra.mxu0 0.0
    %564 = vmatprep.subr.mxu0 0.0
    %565 = vmatpush1.msra.mxu0 0.0
    %566 = vmatprep.subr.mxu0 0.0
    %567 = vmatpush1.msra.mxu0 0.0
    %568 = vmatprep.subr.mxu0 0.0
    %569 = vmatpush1.msra.mxu0 0.0
    %570 = vmatprep.subr.mxu0 0.0
    %571 = vmatpush1.msra.mxu0 0.0
    %572 = vmatprep.subr.mxu0 0.0
    %573 = vmatpush1.msra.mxu0 0.0
    %574 = vmatprep.subr.mxu0 0.0
    %575 = vmatpush1.msra.mxu0 0.0
    %576 = vmatprep.subr.mxu0 0.0
    %577 = vmatpush1.msra.mxu0 0.0
    %578 = vmatprep.subr.mxu0 0.0
    %579 = vmatpush1.msra.mxu0 0.0
    %580 = vmatprep.subr.mxu0 0.0
    %581 = vmatpush1.msra.mxu0 0.0
    %582 = vmatprep.subr.mxu0 0.0
    %583 = vmatpush1.msra.mxu0 0.0
    %584 = vmatprep.subr.mxu0 0.0
    %585 = vmatpush1.msra.mxu0 0.0
    %586 = vmatprep.mubr.f32.mxu0 0.0
    %587 = vmatmul.mubr.f32.gmra.mrb[0].mxu0 %v520
    %v588 = vpop.f32.mrb[0].mxu0
    %v589 = vadd.f32 0.0, %v588
    %v590 = vpop.f32.mrb[0].mxu0
    %591 = vdwg.mxu0
    %592 = vrot.lane.b32.xlu0 %v305, 120
    %v593 = vpop.permute.xlu0 %592
    %594 = vrot.lane.b32.xlu0 %v399, 120
    %v595 = vpop.permute.xlu0 %594
    %596 = vrot.lane.b32.xlu0 %v404, 120
    %v597 = vpop.permute.xlu0 %596
    %v598 = vsel %vm422, %v593, 0
    %v600 = vsel %vm422, %v595, 0
    %v602 = vsel %vm422, %v597, 0
    %604 = vmatprep.subr.mxu0 0.0
    %605 = vmatpush1.xpose.msra.mxu0 %v600
    %606 = vmatprep.subr.mxu0 0.0
    %607 = vmatpush1.xpose.msra.mxu0 %v602
    %608 = vmatprep.subr.mxu0 0.0
    %609 = vmatpush1.xpose.msra.mxu0 0.0
    %610 = vmatprep.subr.mxu0 0.0
    %611 = vmatpush1.xpose.msra.mxu0 0.0
    %612 = vmatprep.subr.mxu0 0.0
    %613 = vmatpush1.xpose.msra.mxu0 0.0
    %614 = vmatprep.subr.mxu0 0.0
    %615 = vmatpush1.xpose.msra.mxu0 0.0
    %616 = vmatprep.subr.mxu0 0.0
    %617 = vmatpush1.xpose.msra.mxu0 0.0
    %618 = vmatprep.subr.mxu0 0.0
    %619 = vmatpush1.xpose.msra.mxu0 0.0
    %620 = vmatprep.subr.mxu0 0.0
    %621 = vmatpush1.xpose.msra.mxu0 0.0
    %622 = vmatprep.subr.mxu0 0.0
    %623 = vmatpush1.xpose.msra.mxu0 0.0
    %624 = vmatprep.subr.mxu0 0.0
    %625 = vmatpush1.xpose.msra.mxu0 0.0
    %626 = vmatprep.subr.mxu0 0.0
    %627 = vmatpush1.xpose.msra.mxu0 0.0
    %628 = vmatprep.subr.mxu0 0.0
    %629 = vmatpush1.xpose.msra.mxu0 0.0
    %630 = vmatprep.subr.mxu0 0.0
    %631 = vmatpush1.xpose.msra.mxu0 0.0
    %632 = vmatprep.subr.mxu0 0.0
    %633 = vmatpush1.xpose.msra.mxu0 0.0
    %634 = vmatprep.subr.mxu0 0.0
    %635 = vmatpush1.xpose.msra.mxu0 0.0
    %636 = vmatprep.subr.mxu0 0.0
    %637 = vmatpush1.xpose.msra.mxu0 0.0
    %638 = vmatprep.subr.mxu0 0.0
    %639 = vmatpush1.xpose.msra.mxu0 0.0
    %640 = vmatprep.subr.mxu0 0.0
    %641 = vmatpush1.xpose.msra.mxu0 0.0
    %642 = vmatprep.subr.mxu0 0.0
    %643 = vmatpush1.xpose.msra.mxu0 0.0
    %644 = vmatprep.subr.mxu0 0.0
    %645 = vmatpush1.xpose.msra.mxu0 0.0
    %646 = vmatprep.subr.mxu0 0.0
    %647 = vmatpush1.xpose.msra.mxu0 0.0
    %648 = vmatprep.subr.mxu0 0.0
    %649 = vmatpush1.xpose.msra.mxu0 0.0
    %650 = vmatprep.subr.mxu0 0.0
    %651 = vmatpush1.xpose.msra.mxu0 0.0
    %652 = vmatprep.subr.mxu0 0.0
    %653 = vmatpush1.xpose.msra.mxu0 0.0
    %654 = vmatprep.subr.mxu0 0.0
    %655 = vmatpush1.xpose.msra.mxu0 0.0
    %656 = vmatprep.subr.mxu0 0.0
    %657 = vmatpush1.xpose.msra.mxu0 0.0
    %658 = vmatprep.subr.mxu0 0.0
    %659 = vmatpush1.xpose.msra.mxu0 0.0
    %660 = vmatprep.subr.mxu0 0.0
    %661 = vmatpush1.xpose.msra.mxu0 0.0
    %662 = vmatprep.subr.mxu0 0.0
    %663 = vmatpush1.xpose.msra.mxu0 0.0
    %664 = vmatprep.subr.mxu0 0.0
    %665 = vmatpush1.xpose.msra.mxu0 0.0
    %666 = vmatprep.subr.mxu0 0.0
    %667 = vmatpush1.xpose.msra.mxu0 0.0
    %668 = vmatprep.mubr.f32.mxu0 0.0
    %669 = vmatmul.mubr.f32.gmra.mrb[0].mxu0 %v598
    %v670 = vpop.f32.mrb[0].mxu0
    %v671 = vadd.f32 0.0, %v670
    %v672 = vpop.f32.mrb[0].mxu0
    %673 = vdwg.mxu0
    %v674 = vsel %vm141, %v671, -inf
    %675 = vmax.xlane.f32.xlu0 %v674
    %v676 = vpop.xlane.xlu0 %675
    %v677 = vsub.f32 %v671, %v676
    %v678 = vmul.f32 %v677, 1.442695
    %v679 = vpow.pop %v678
    %v680 = vsel %vm141, %v679, 0.0
    %681 = vadd.xlane.f32.xlu0 %v680
    %v682 = vpop.xlane.xlu0 %681
    %v683 = vrcp.pop %v682
    %v684 = vmul.f32 %v679, %v683
    %685 = vrot.lane.b32.xlu0 %v399, 88
    %v686 = vpop.permute.xlu0 %685
    %687 = vrot.lane.b32.xlu0 %v404, 88
    %v688 = vpop.permute.xlu0 %687
    %v692 = vsel %vm141, %v684, 0
    %694 = vmatprep.subr.mxu0 0.0
    %695 = vmatpush1.msra.mxu0 %v686
    %696 = vmatprep.subr.mxu0 0.0
    %697 = vmatpush1.msra.mxu0 %v688
    %698 = vmatprep.subr.mxu0 0.0
    %699 = vmatpush1.msra.mxu0 0.0
    %700 = vmatprep.subr.mxu0 0.0
    %701 = vmatpush1.msra.mxu0 0.0
    %702 = vmatprep.subr.mxu0 0.0
    %703 = vmatpush1.msra.mxu0 0.0
    %704 = vmatprep.subr.mxu0 0.0
    %705 = vmatpush1.msra.mxu0 0.0
    %706 = vmatprep.subr.mxu0 0.0
    %707 = vmatpush1.msra.mxu0 0.0
    %708 = vmatprep.subr.mxu0 0.0
    %709 = vmatpush1.msra.mxu0 0.0
    %710 = vmatprep.subr.mxu0 0.0
    %711 = vmatpush1.msra.mxu0 0.0
    %712 = vmatprep.subr.mxu0 0.0
    %713 = vmatpush1.msra.mxu0 0.0
    %714 = vmatprep.subr.mxu0 0.0
    %715 = vmatpush1.msra.mxu0 0.0
    %716 = vmatprep.subr.mxu0 0.0
    %717 = vmatpush1.msra.mxu0 0.0
    %718 = vmatprep.subr.mxu0 0.0
    %719 = vmatpush1.msra.mxu0 0.0
    %720 = vmatprep.subr.mxu0 0.0
    %721 = vmatpush1.msra.mxu0 0.0
    %722 = vmatprep.subr.mxu0 0.0
    %723 = vmatpush1.msra.mxu0 0.0
    %724 = vmatprep.subr.mxu0 0.0
    %725 = vmatpush1.msra.mxu0 0.0
    %726 = vmatprep.subr.mxu0 0.0
    %727 = vmatpush1.msra.mxu0 0.0
    %728 = vmatprep.subr.mxu0 0.0
    %729 = vmatpush1.msra.mxu0 0.0
    %730 = vmatprep.subr.mxu0 0.0
    %731 = vmatpush1.msra.mxu0 0.0
    %732 = vmatprep.subr.mxu0 0.0
    %733 = vmatpush1.msra.mxu0 0.0
    %734 = vmatprep.subr.mxu0 0.0
    %735 = vmatpush1.msra.mxu0 0.0
    %736 = vmatprep.subr.mxu0 0.0
    %737 = vmatpush1.msra.mxu0 0.0
    %738 = vmatprep.subr.mxu0 0.0
    %739 = vmatpush1.msra.mxu0 0.0
    %740 = vmatprep.subr.mxu0 0.0
    %741 = vmatpush1.msra.mxu0 0.0
    %742 = vmatprep.subr.mxu0 0.0
    %743 = vmatpush1.msra.mxu0 0.0
    %744 = vmatprep.subr.mxu0 0.0
    %745 = vmatpush1.msra.mxu0 0.0
    %746 = vmatprep.subr.mxu0 0.0
    %747 = vmatpush1.msra.mxu0 0.0
    %748 = vmatprep.subr.mxu0 0.0
    %749 = vmatpush1.msra.mxu0 0.0
    %750 = vmatprep.subr.mxu0 0.0
    %751 = vmatpush1.msra.mxu0 0.0
    %752 = vmatprep.subr.mxu0 0.0
    %753 = vmatpush1.msra.mxu0 0.0
    %754 = vmatprep.subr.mxu0 0.0
    %755 = vmatpush1.msra.mxu0 0.0
    %756 = vmatprep.subr.mxu0 0.0
    %757 = vmatpush1.msra.mxu0 0.0
    %758 = vmatprep.mubr.f32.mxu0 0.0
    %759 = vmatmul.mubr.f32.gmra.mrb[0].mxu0 %v692
    %v760 = vpop.f32.mrb[0].mxu0
    %v761 = vadd.f32 0.0, %v760
    %v762 = vpop.f32.mrb[0].mxu0
    %763 = vdwg.mxu0
    %764 = vrot.lane.b32.xlu0 %v305, 112
    %v765 = vpop.permute.xlu0 %764
    %766 = vrot.lane.b32.xlu0 %v399, 112
    %v767 = vpop.permute.xlu0 %766
    %768 = vrot.lane.b32.xlu0 %v404, 112
    %v769 = vpop.permute.xlu0 %768
    %v770 = vsel %vm422, %v765, 0
    %v772 = vsel %vm422, %v767, 0
    %v774 = vsel %vm422, %v769, 0
    %776 = vmatprep.subr.mxu0 0.0
    %777 = vmatpush1.xpose.msra.mxu0 %v772
    %778 = vmatprep.subr.mxu0 0.0
    %779 = vmatpush1.xpose.msra.mxu0 %v774
    %780 = vmatprep.subr.mxu0 0.0
    %781 = vmatpush1.xpose.msra.mxu0 0.0
    %782 = vmatprep.subr.mxu0 0.0
    %783 = vmatpush1.xpose.msra.mxu0 0.0
    %784 = vmatprep.subr.mxu0 0.0
    %785 = vmatpush1.xpose.msra.mxu0 0.0
    %786 = vmatprep.subr.mxu0 0.0
    %787 = vmatpush1.xpose.msra.mxu0 0.0
    %788 = vmatprep.subr.mxu0 0.0
    %789 = vmatpush1.xpose.msra.mxu0 0.0
    %790 = vmatprep.subr.mxu0 0.0
    %791 = vmatpush1.xpose.msra.mxu0 0.0
    %792 = vmatprep.subr.mxu0 0.0
    %793 = vmatpush1.xpose.msra.mxu0 0.0
    %794 = vmatprep.subr.mxu0 0.0
    %795 = vmatpush1.xpose.msra.mxu0 0.0
    %796 = vmatprep.subr.mxu0 0.0
    %797 = vmatpush1.xpose.msra.mxu0 0.0
    %798 = vmatprep.subr.mxu0 0.0
    %799 = vmatpush1.xpose.msra.mxu0 0.0
    %800 = vmatprep.subr.mxu0 0.0
    %801 = vmatpush1.xpose.msra.mxu0 0.0
    %802 = vmatprep.subr.mxu0 0.0
    %803 = vmatpush1.xpose.msra.mxu0 0.0
    %804 = vmatprep.subr.mxu0 0.0
    %805 = vmatpush1.xpose.msra.mxu0 0.0
    %806 = vmatprep.subr.mxu0 0.0
    %807 = vmatpush1.xpose.msra.mxu0 0.0
    %808 = vmatprep.subr.mxu0 0.0
    %809 = vmatpush1.xpose.msra.mxu0 0.0
    %810 = vmatprep.subr.mxu0 0.0
    %811 = vmatpush1.xpose.msra.mxu0 0.0
    %812 = vmatprep.subr.mxu0 0.0
    %813 = vmatpush1.xpose.msra.mxu0 0.0
    %814 = vmatprep.subr.mxu0 0.0
    %815 = vmatpush1.xpose.msra.mxu0 0.0
    %816 = vmatprep.subr.mxu0 0.0
    %817 = vmatpush1.xpose.msra.mxu0 0.0
    %818 = vmatprep.subr.mxu0 0.0
    %819 = vmatpush1.xpose.msra.mxu0 0.0
    %820 = vmatprep.subr.mxu0 0.0
    %821 = vmatpush1.xpose.msra.mxu0 0.0
    %822 = vmatprep.subr.mxu0 0.0
    %823 = vmatpush1.xpose.msra.mxu0 0.0
    %824 = vmatprep.subr.mxu0 0.0
    %825 = vmatpush1.xpose.msra.mxu0 0.0
    %826 = vmatprep.subr.mxu0 0.0
    %827 = vmatpush1.xpose.msra.mxu0 0.0
    %828 = vmatprep.subr.mxu0 0.0
    %829 = vmatpush1.xpose.msra.mxu0 0.0
    %830 = vmatprep.subr.mxu0 0.0
    %831 = vmatpush1.xpose.msra.mxu0 0.0
    %832 = vmatprep.subr.mxu0 0.0
    %833 = vmatpush1.xpose.msra.mxu0 0.0
    %834 = vmatprep.subr.mxu0 0.0
    %835 = vmatpush1.xpose.msra.mxu0 0.0
    %836 = vmatprep.subr.mxu0 0.0
    %837 = vmatpush1.xpose.msra.mxu0 0.0
    %838 = vmatprep.subr.mxu0 0.0
    %839 = vmatpush1.xpose.msra.mxu0 0.0
    %840 = vmatprep.mubr.f32.mxu0 0.0
    %841 = vmatmul.mubr.f32.gmra.mrb[0].mxu0 %v770
    %v842 = vpop.f32.mrb[0].mxu0
    %v843 = vadd.f32 0.0, %v842
    %v844 = vpop.f32.mrb[0].mxu0
    %845 = vdwg.mxu0
    %v846 = vsel %vm141, %v843, -inf
    %847 = vmax.xlane.f32.xlu0 %v846
    %v848 = vpop.xlane.xlu0 %847
    %v849 = vsub.f32 %v843, %v848
    %v850 = vmul.f32 %v849, 1.442695
    %v851 = vpow.pop %v850
    %v852 = vsel %vm141, %v851, 0.0
    %853 = vadd.xlane.f32.xlu0 %v852
    %v854 = vpop.xlane.xlu0 %853
    %v855 = vrcp.pop %v854
    %v856 = vmul.f32 %v851, %v855
    %857 = vrot.lane.b32.xlu0 %v399, 80
    %v858 = vpop.permute.xlu0 %857
    %859 = vrot.lane.b32.xlu0 %v404, 80
    %v860 = vpop.permute.xlu0 %859
    %v864 = vsel %vm141, %v856, 0
    %866 = vmatprep.subr.mxu0 0.0
    %867 = vmatpush1.msra.mxu0 %v858
    %868 = vmatprep.subr.mxu0 0.0
    %869 = vmatpush1.msra.mxu0 %v860
    %870 = vmatprep.subr.mxu0 0.0
    %871 = vmatpush1.msra.mxu0 0.0
    %872 = vmatprep.subr.mxu0 0.0
    %873 = vmatpush1.msra.mxu0 0.0
    %874 = vmatprep.subr.mxu0 0.0
    %875 = vmatpush1.msra.mxu0 0.0
    %876 = vmatprep.subr.mxu0 0.0
    %877 = vmatpush1.msra.mxu0 0.0
    %878 = vmatprep.subr.mxu0 0.0
    %879 = vmatpush1.msra.mxu0 0.0
    %880 = vmatprep.subr.mxu0 0.0
    %881 = vmatpush1.msra.mxu0 0.0
    %882 = vmatprep.subr.mxu0 0.0
    %883 = vmatpush1.msra.mxu0 0.0
    %884 = vmatprep.subr.mxu0 0.0
    %885 = vmatpush1.msra.mxu0 0.0
    %886 = vmatprep.subr.mxu0 0.0
    %887 = vmatpush1.msra.mxu0 0.0
    %888 = vmatprep.subr.mxu0 0.0
    %889 = vmatpush1.msra.mxu0 0.0
    %890 = vmatprep.subr.mxu0 0.0
    %891 = vmatpush1.msra.mxu0 0.0
    %892 = vmatprep.subr.mxu0 0.0
    %893 = vmatpush1.msra.mxu0 0.0
    %894 = vmatprep.subr.mxu0 0.0
    %895 = vmatpush1.msra.mxu0 0.0
    %896 = vmatprep.subr.mxu0 0.0
    %897 = vmatpush1.msra.mxu0 0.0
    %898 = vmatprep.subr.mxu0 0.0
    %899 = vmatpush1.msra.mxu0 0.0
    %900 = vmatprep.subr.mxu0 0.0
    %901 = vmatpush1.msra.mxu0 0.0
    %902 = vmatprep.subr.mxu0 0.0
    %903 = vmatpush1.msra.mxu0 0.0
    %904 = vmatprep.subr.mxu0 0.0
    %905 = vmatpush1.msra.mxu0 0.0
    %906 = vmatprep.subr.mxu0 0.0
    %907 = vmatpush1.msra.mxu0 0.0
    %908 = vmatprep.subr.mxu0 0.0
    %909 = vmatpush1.msra.mxu0 0.0
    %910 = vmatprep.subr.mxu0 0.0
    %911 = vmatpush1.msra.mxu0 0.0
    %912 = vmatprep.subr.mxu0 0.0
    %913 = vmatpush1.msra.mxu0 0.0
    %914 = vmatprep.subr.mxu0 0.0
    %915 = vmatpush1.msra.mxu0 0.0
    %916 = vmatprep.subr.mxu0 0.0
    %917 = vmatpush1.msra.mxu0 0.0
    %918 = vmatprep.subr.mxu0 0.0
    %919 = vmatpush1.msra.mxu0 0.0
    %920 = vmatprep.subr.mxu0 0.0
    %921 = vmatpush1.msra.mxu0 0.0
    %922 = vmatprep.subr.mxu0 0.0
    %923 = vmatpush1.msra.mxu0 0.0
    %924 = vmatprep.subr.mxu0 0.0
    %925 = vmatpush1.msra.mxu0 0.0
    %926 = vmatprep.subr.mxu0 0.0
    %927 = vmatpush1.msra.mxu0 0.0
    %928 = vmatprep.subr.mxu0 0.0
    %929 = vmatpush1.msra.mxu0 0.0
    %930 = vmatprep.mubr.f32.mxu0 0.0
    %931 = vmatmul.mubr.f32.gmra.mrb[0].mxu0 %v864
    %v932 = vpop.f32.mrb[0].mxu0
    %v933 = vadd.f32 0.0, %v932
    %v934 = vpop.f32.mrb[0].mxu0
    %935 = vdwg.mxu0
    %936 = vrot.lane.b32.xlu0 %v305, 104
    %v937 = vpop.permute.xlu0 %936
    %938 = vrot.lane.b32.xlu0 %v399, 104
    %v939 = vpop.permute.xlu0 %938
    %940 = vrot.lane.b32.xlu0 %v404, 104
    %v941 = vpop.permute.xlu0 %940
    %v942 = vsel %vm422, %v937, 0
    %v944 = vsel %vm422, %v939, 0
    %v946 = vsel %vm422, %v941, 0
    %948 = vmatprep.subr.mxu0 0.0
    %949 = vmatpush1.xpose.msra.mxu0 %v944
    %950 = vmatprep.subr.mxu0 0.0
    %951 = vmatpush1.xpose.msra.mxu0 %v946
    %952 = vmatprep.subr.mxu0 0.0
    %953 = vmatpush1.xpose.msra.mxu0 0.0
    %954 = vmatprep.subr.mxu0 0.0
    %955 = vmatpush1.xpose.msra.mxu0 0.0
    %956 = vmatprep.subr.mxu0 0.0
    %957 = vmatpush1.xpose.msra.mxu0 0.0
    %958 = vmatprep.subr.mxu0 0.0
    %959 = vmatpush1.xpose.msra.mxu0 0.0
    %960 = vmatprep.subr.mxu0 0.0
    %961 = vmatpush1.xpose.msra.mxu0 0.0
    %962 = vmatprep.subr.mxu0 0.0
    %963 = vmatpush1.xpose.msra.mxu0 0.0
    %964 = vmatprep.subr.mxu0 0.0
    %965 = vmatpush1.xpose.msra.mxu0 0.0
    %966 = vmatprep.subr.mxu0 0.0
    %967 = vmatpush1.xpose.msra.mxu0 0.0
    %968 = vmatprep.subr.mxu0 0.0
    %969 = vmatpush1.xpose.msra.mxu0 0.0
    %970 = vmatprep.subr.mxu0 0.0
    %971 = vmatpush1.xpose.msra.mxu0 0.0
    %972 = vmatprep.subr.mxu0 0.0
    %973 = vmatpush1.xpose.msra.mxu0 0.0
    %974 = vmatprep.subr.mxu0 0.0
    %975 = vmatpush1.xpose.msra.mxu0 0.0
    %976 = vmatprep.subr.mxu0 0.0
    %977 = vmatpush1.xpose.msra.mxu0 0.0
    %978 = vmatprep.subr.mxu0 0.0
    %979 = vmatpush1.xpose.msra.mxu0 0.0
    %980 = vmatprep.subr.mxu0 0.0
    %981 = vmatpush1.xpose.msra.mxu0 0.0
    %982 = vmatprep.subr.mxu0 0.0
    %983 = vmatpush1.xpose.msra.mxu0 0.0
    %984 = vmatprep.subr.mxu0 0.0
    %985 = vmatpush1.xpose.msra.mxu0 0.0
    %986 = vmatprep.subr.mxu0 0.0
    %987 = vmatpush1.xpose.msra.mxu0 0.0
    %988 = vmatprep.subr.mxu0 0.0
    %989 = vmatpush1.xpose.msra.mxu0 0.0
    %990 = vmatprep.subr.mxu0 0.0
    %991 = vmatpush1.xpose.msra.mxu0 0.0
    %992 = vmatprep.subr.mxu0 0.0
    %993 = vmatpush1.xpose.msra.mxu0 0.0
    %994 = vmatprep.subr.mxu0 0.0
    %995 = vmatpush1.xpose.msra.mxu0 0.0
    %996 = vmatprep.subr.mxu0 0.0
    %997 = vmatpush1.xpose.msra.mxu0 0.0
    %998 = vmatprep.subr.mxu0 0.0
    %999 = vmatpush1.xpose.msra.mxu0 0.0
    %1000 = vmatprep.subr.mxu0 0.0
    %1001 = vmatpush1.xpose.msra.mxu0 0.0
    %1002 = vmatprep.subr.mxu0 0.0
    %1003 = vmatpush1.xpose.msra.mxu0 0.0
    %1004 = vmatprep.subr.mxu0 0.0
    %1005 = vmatpush1.xpose.msra.mxu0 0.0
    %1006 = vmatprep.subr.mxu0 0.0
    %1007 = vmatpush1.xpose.msra.mxu0 0.0
    %1008 = vmatprep.subr.mxu0 0.0
    %1009 = vmatpush1.xpose.msra.mxu0 0.0
    %1010 = vmatprep.subr.mxu0 0.0
    %1011 = vmatpush1.xpose.msra.mxu0 0.0
    %1012 = vmatprep.mubr.f32.mxu0 0.0
    %1013 = vmatmul.mubr.f32.gmra.mrb[0].mxu0 %v942
    %v1014 = vpop.f32.mrb[0].mxu0
    %v1015 = vadd.f32 0.0, %v1014
    %v1016 = vpop.f32.mrb[0].mxu0
    %1017 = vdwg.mxu0
    %v1018 = vsel %vm141, %v1015, -inf
    %1019 = vmax.xlane.f32.xlu0 %v1018
    %v1020 = vpop.xlane.xlu0 %1019
    %v1021 = vsub.f32 %v1015, %v1020
    %v1022 = vmul.f32 %v1021, 1.442695
    %v1023 = vpow.pop %v1022
    %v1024 = vsel %vm141, %v1023, 0.0
    %1025 = vadd.xlane.f32.xlu0 %v1024
    %v1026 = vpop.xlane.xlu0 %1025
    %v1027 = vrcp.pop %v1026
    %v1028 = vmul.f32 %v1023, %v1027
    %1029 = vrot.lane.b32.xlu0 %v399, 72
    %v1030 = vpop.permute.xlu0 %1029
    %1031 = vrot.lane.b32.xlu0 %v404, 72
    %v1032 = vpop.permute.xlu0 %1031
    %v1036 = vsel %vm141, %v1028, 0
    %1038 = vmatprep.subr.mxu0 0.0
    %1039 = vmatpush1.msra.mxu0 %v1030
    %1040 = vmatprep.subr.mxu0 0.0
    %1041 = vmatpush1.msra.mxu0 %v1032
    %1042 = vmatprep.subr.mxu0 0.0
    %1043 = vmatpush1.msra.mxu0 0.0
    %1044 = vmatprep.subr.mxu0 0.0
    %1045 = vmatpush1.msra.mxu0 0.0
    %1046 = vmatprep.subr.mxu0 0.0
    %1047 = vmatpush1.msra.mxu0 0.0
    %1048 = vmatprep.subr.mxu0 0.0
    %1049 = vmatpush1.msra.mxu0 0.0
    %1050 = vmatprep.subr.mxu0 0.0
    %1051 = vmatpush1.msra.mxu0 0.0
    %1052 = vmatprep.subr.mxu0 0.0
    %1053 = vmatpush1.msra.mxu0 0.0
    %1054 = vmatprep.subr.mxu0 0.0
    %1055 = vmatpush1.msra.mxu0 0.0
    %1056 = vmatprep.subr.mxu0 0.0
    %1057 = vmatpush1.msra.mxu0 0.0
    %1058 = vmatprep.subr.mxu0 0.0
    %1059 = vmatpush1.msra.mxu0 0.0
    %1060 = vmatprep.subr.mxu0 0.0
    %1061 = vmatpush1.msra.mxu0 0.0
    %1062 = vmatprep.subr.mxu0 0.0
    %1063 = vmatpush1.msra.mxu0 0.0
    %1064 = vmatprep.subr.mxu0 0.0
    %1065 = vmatpush1.msra.mxu0 0.0
    %1066 = vmatprep.subr.mxu0 0.0
    %1067 = vmatpush1.msra.mxu0 0.0
    %1068 = vmatprep.subr.mxu0 0.0
    %1069 = vmatpush1.msra.mxu0 0.0
    %1070 = vmatprep.subr.mxu0 0.0
    %1071 = vmatpush1.msra.mxu0 0.0
    %1072 = vmatprep.subr.mxu0 0.0
    %1073 = vmatpush1.msra.mxu0 0.0
    %1074 = vmatprep.subr.mxu0 0.0
    %1075 = vmatpush1.msra.mxu0 0.0
    %1076 = vmatprep.subr.mxu0 0.0
    %1077 = vmatpush1.msra.mxu0 0.0
    %1078 = vmatprep.subr.mxu0 0.0
    %1079 = vmatpush1.msra.mxu0 0.0
    %1080 = vmatprep.subr.mxu0 0.0
    %1081 = vmatpush1.msra.mxu0 0.0
    %1082 = vmatprep.subr.mxu0 0.0
    %1083 = vmatpush1.msra.mxu0 0.0
    %1084 = vmatprep.subr.mxu0 0.0
    %1085 = vmatpush1.msra.mxu0 0.0
    %1086 = vmatprep.subr.mxu0 0.0
    %1087 = vmatpush1.msra.mxu0 0.0
    %1088 = vmatprep.subr.mxu0 0.0
    %1089 = vmatpush1.msra.mxu0 0.0
    %1090 = vmatprep.subr.mxu0 0.0
    %1091 = vmatpush1.msra.mxu0 0.0
    %1092 = vmatprep.subr.mxu0 0.0
    %1093 = vmatpush1.msra.mxu0 0.0
    %1094 = vmatprep.subr.mxu0 0.0
    %1095 = vmatpush1.msra.mxu0 0.0
    %1096 = vmatprep.subr.mxu0 0.0
    %1097 = vmatpush1.msra.mxu0 0.0
    %1098 = vmatprep.subr.mxu0 0.0
    %1099 = vmatpush1.msra.mxu0 0.0
    %1100 = vmatprep.subr.mxu0 0.0
    %1101 = vmatpush1.msra.mxu0 0.0
    %1102 = vmatprep.mubr.f32.mxu0 0.0
    %1103 = vmatmul.mubr.f32.gmra.mrb[0].mxu0 %v1036
    %v1104 = vpop.f32.mrb[0].mxu0
    %v1105 = vadd.f32 0.0, %v1104
    %v1106 = vpop.f32.mrb[0].mxu0
    %1107 = vdwg.mxu0
    %1109 = vrot.lane.b32.xlu0 %v761, 8
    %v1110 = vpop.permute.xlu0 %1109
    %1113 = vrot.lane.b32.xlu0 %v933, 16
    %v1114 = vpop.permute.xlu0 %1113
    %1117 = vrot.lane.b32.xlu0 %v1105, 24
    %v1118 = vpop.permute.xlu0 %1117
    %v1120 = vsel %vm422, %v589, %v1110
    %v1121 = vsel %vm141, %v1120, %v1114
    %vm1122 = vcmask 195584
    %v1123 = vsel %vm1122, %v1121, %v1118
    %v1124 = vlaneseq
    %v1125 = vshrl.u32 %v1124, 7
    %v1126 = vsub.s32 0, %v1125
    %v1127 = vrot.slane %v421, %v1126
    %v1129 = vsel %vm93, %v1123, 0
    %1131 = vmatprep.subr.mxu0 0.0
    %1132 = vmatpush1.msra.mxu0 %v417
    %1133 = vmatprep.subr.mxu0 0.0
    %1134 = vmatpush1.msra.mxu0 %v418
    %1135 = vmatprep.subr.mxu0 0.0
    %1136 = vmatpush1.msra.mxu0 %v419
    %1137 = vmatprep.subr.mxu0 0.0
    %1138 = vmatpush1.msra.mxu0 %v420
    %1139 = vmatprep.subr.mxu0 0.0
    %1140 = vmatpush1.msra.mxu0 0.0
    %1141 = vmatprep.subr.mxu0 0.0
    %1142 = vmatpush1.msra.mxu0 0.0
    %1143 = vmatprep.subr.mxu0 0.0
    %1144 = vmatpush1.msra.mxu0 0.0
    %1145 = vmatprep.subr.mxu0 0.0
    %1146 = vmatpush1.msra.mxu0 0.0
    %1147 = vmatprep.subr.mxu0 0.0
    %1148 = vmatpush1.msra.mxu0 0.0
    %1149 = vmatprep.subr.mxu0 0.0
    %1150 = vmatpush1.msra.mxu0 0.0
    %1151 = vmatprep.subr.mxu0 0.0
    %1152 = vmatpush1.msra.mxu0 0.0
    %1153 = vmatprep.subr.mxu0 0.0
    %1154 = vmatpush1.msra.mxu0 0.0
    %1155 = vmatprep.subr.mxu0 0.0
    %1156 = vmatpush1.msra.mxu0 0.0
    %1157 = vmatprep.subr.mxu0 0.0
    %1158 = vmatpush1.msra.mxu0 0.0
    %1159 = vmatprep.subr.mxu0 0.0
    %1160 = vmatpush1.msra.mxu0 0.0
    %1161 = vmatprep.subr.mxu0 0.0
    %1162 = vmatpush1.msra.mxu0 0.0
    %1163 = vmatprep.subr.mxu0 0.0
    %1164 = vmatpush1.msra.mxu0 0.0
    %1165 = vmatprep.subr.mxu0 0.0
    %1166 = vmatpush1.msra.mxu0 0.0
    %1167 = vmatprep.subr.mxu0 0.0
    %1168 = vmatpush1.msra.mxu0 0.0
    %1169 = vmatprep.subr.mxu0 0.0
    %1170 = vmatpush1.msra.mxu0 0.0
    %1171 = vmatprep.subr.mxu0 0.0
    %1172 = vmatpush1.msra.mxu0 0.0
    %1173 = vmatprep.subr.mxu0 0.0
    %1174 = vmatpush1.msra.mxu0 0.0
    %1175 = vmatprep.subr.mxu0 0.0
    %1176 = vmatpush1.msra.mxu0 0.0
    %1177 = vmatprep.subr.mxu0 0.0
    %1178 = vmatpush1.msra.mxu0 0.0
    %1179 = vmatprep.subr.mxu0 0.0
    %1180 = vmatpush1.msra.mxu0 0.0
    %1181 = vmatprep.subr.mxu0 0.0
    %1182 = vmatpush1.msra.mxu0 0.0
    %1183 = vmatprep.subr.mxu0 0.0
    %1184 = vmatpush1.msra.mxu0 0.0
    %1185 = vmatprep.subr.mxu0 0.0
    %1186 = vmatpush1.msra.mxu0 0.0
    %1187 = vmatprep.subr.mxu0 0.0
    %1188 = vmatpush1.msra.mxu0 0.0
    %1189 = vmatprep.subr.mxu0 0.0
    %1190 = vmatpush1.msra.mxu0 0.0
    %1191 = vmatprep.subr.mxu0 0.0
    %1192 = vmatpush1.msra.mxu0 0.0
    %1193 = vmatprep.subr.mxu0 0.0
    %1194 = vmatpush1.msra.mxu0 0.0
    %1195 = vmatprep.mubr.f32.mxu0 0.0
    %1196 = vmatmul.mubr.f32.gmra.mrb[0].mxu0 %v1129
    %v1197 = vpop.f32.mrb[0].mxu0
    %v1198 = vadd.f32 %v1127, %v1197
    %v1199 = vpop.f32.mrb[0].mxu0
    %1200 = vdwg.mxu0
    %v1201 = vadd.f32 %v1198, %v85
    %v1203 = vsel %vm422, %v310, 0
    %v1206 = vsel %vm422, %v409, 0
    %v1209 = vsel %vm422, %v414, 0
    %1211 = vmatprep.subr.mxu0 0.0
    %1212 = vmatpush1.xpose.msra.mxu0 %v1206
    %1213 = vmatprep.subr.mxu0 0.0
    %1214 = vmatpush1.xpose.msra.mxu0 %v1209
    %1215 = vmatprep.subr.mxu0 0.0
    %1216 = vmatpush1.xpose.msra.mxu0 0.0
    %1217 = vmatprep.subr.mxu0 0.0
    %1218 = vmatpush1.xpose.msra.mxu0 0.0
    %1219 = vmatprep.subr.mxu0 0.0
    %1220 = vmatpush1.xpose.msra.mxu0 0.0
    %1221 = vmatprep.subr.mxu0 0.0
    %1222 = vmatpush1.xpose.msra.mxu0 0.0
    %1223 = vmatprep.subr.mxu0 0.0
    %1224 = vmatpush1.xpose.msra.mxu0 0.0
    %1225 = vmatprep.subr.mxu0 0.0
    %1226 = vmatpush1.xpose.msra.mxu0 0.0
    %1227 = vmatprep.subr.mxu0 0.0
    %1228 = vmatpush1.xpose.msra.mxu0 0.0
    %1229 = vmatprep.subr.mxu0 0.0
    %1230 = vmatpush1.xpose.msra.mxu0 0.0
    %1231 = vmatprep.subr.mxu0 0.0
    %1232 = vmatpush1.xpose.msra.mxu0 0.0
    %1233 = vmatprep.subr.mxu0 0.0
    %1234 = vmatpush1.xpose.msra.mxu0 0.0
    %1235 = vmatprep.subr.mxu0 0.0
    %1236 = vmatpush1.xpose.msra.mxu0 0.0
    %1237 = vmatprep.subr.mxu0 0.0
    %1238 = vmatpush1.xpose.msra.mxu0 0.0
    %1239 = vmatprep.subr.mxu0 0.0
    %1240 = vmatpush1.xpose.msra.mxu0 0.0
    %1241 = vmatprep.subr.mxu0 0.0
    %1242 = vmatpush1.xpose.msra.mxu0 0.0
    %1243 = vmatprep.subr.mxu0 0.0
    %1244 = vmatpush1.xpose.msra.mxu0 0.0
    %1245 = vmatprep.subr.mxu0 0.0
    %1246 = vmatpush1.xpose.msra.mxu0 0.0
    %1247 = vmatprep.subr.mxu0 0.0
    %1248 = vmatpush1.xpose.msra.mxu0 0.0
    %1249 = vmatprep.subr.mxu0 0.0
    %1250 = vmatpush1.xpose.msra.mxu0 0.0
    %1251 = vmatprep.subr.mxu0 0.0
    %1252 = vmatpush1.xpose.msra.mxu0 0.0
    %1253 = vmatprep.subr.mxu0 0.0
    %1254 = vmatpush1.xpose.msra.mxu0 0.0
    %1255 = vmatprep.subr.mxu0 0.0
    %1256 = vmatpush1.xpose.msra.mxu0 0.0
    %1257 = vmatprep.subr.mxu0 0.0
    %1258 = vmatpush1.xpose.msra.mxu0 0.0
    %1259 = vmatprep.subr.mxu0 0.0
    %1260 = vmatpush1.xpose.msra.mxu0 0.0
    %1261 = vmatprep.subr.mxu0 0.0
    %1262 = vmatpush1.xpose.msra.mxu0 0.0
    %1263 = vmatprep.subr.mxu0 0.0
    %1264 = vmatpush1.xpose.msra.mxu0 0.0
    %1265 = vmatprep.subr.mxu0 0.0
    %1266 = vmatpush1.xpose.msra.mxu0 0.0
    %1267 = vmatprep.subr.mxu0 0.0
    %1268 = vmatpush1.xpose.msra.mxu0 0.0
    %1269 = vmatprep.subr.mxu0 0.0
    %1270 = vmatpush1.xpose.msra.mxu0 0.0
    %1271 = vmatprep.subr.mxu0 0.0
    %1272 = vmatpush1.xpose.msra.mxu0 0.0
    %1273 = vmatprep.subr.mxu0 0.0
    %1274 = vmatpush1.xpose.msra.mxu0 0.0
    %1275 = vmatprep.mubr.f32.mxu0 0.0
    %1276 = vmatmul.mubr.f32.gmra.mrb[0].mxu0 %v1203
    %v1277 = vpop.f32.mrb[0].mxu0
    %v1278 = vadd.f32 0.0, %v1277
    %v1279 = vpop.f32.mrb[0].mxu0
    %1280 = vdwg.mxu0
    %v1281 = vsel %vm141, %v1278, -inf
    %1282 = vmax.xlane.f32.xlu0 %v1281
    %v1283 = vpop.xlane.xlu0 %1282
    %v1284 = vsub.f32 %v1278, %v1283
    %v1285 = vmul.f32 %v1284, 1.442695
    %v1286 = vpow.pop %v1285
    %v1287 = vsel %vm141, %v1286, 0.0
    %1288 = vadd.xlane.f32.xlu0 %v1287
    %v1289 = vpop.xlane.xlu0 %1288
    %v1290 = vrcp.pop %v1289
    %v1291 = vmul.f32 %v1286, %v1290
    %1292 = vrot.lane.b32.xlu0 %v409, 96
    %v1293 = vpop.permute.xlu0 %1292
    %1294 = vrot.lane.b32.xlu0 %v414, 96
    %v1295 = vpop.permute.xlu0 %1294
    %v1299 = vsel %vm141, %v1291, 0
    %1301 = vmatprep.subr.mxu0 0.0
    %1302 = vmatpush1.msra.mxu0 %v1293
    %1303 = vmatprep.subr.mxu0 0.0
    %1304 = vmatpush1.msra.mxu0 %v1295
    %1305 = vmatprep.subr.mxu0 0.0
    %1306 = vmatpush1.msra.mxu0 0.0
    %1307 = vmatprep.subr.mxu0 0.0
    %1308 = vmatpush1.msra.mxu0 0.0
    %1309 = vmatprep.subr.mxu0 0.0
    %1310 = vmatpush1.msra.mxu0 0.0
    %1311 = vmatprep.subr.mxu0 0.0
    %1312 = vmatpush1.msra.mxu0 0.0
    %1313 = vmatprep.subr.mxu0 0.0
    %1314 = vmatpush1.msra.mxu0 0.0
    %1315 = vmatprep.subr.mxu0 0.0
    %1316 = vmatpush1.msra.mxu0 0.0
    %1317 = vmatprep.subr.mxu0 0.0
    %1318 = vmatpush1.msra.mxu0 0.0
    %1319 = vmatprep.subr.mxu0 0.0
    %1320 = vmatpush1.msra.mxu0 0.0
    %1321 = vmatprep.subr.mxu0 0.0
    %1322 = vmatpush1.msra.mxu0 0.0
    %1323 = vmatprep.subr.mxu0 0.0
    %1324 = vmatpush1.msra.mxu0 0.0
    %1325 = vmatprep.subr.mxu0 0.0
    %1326 = vmatpush1.msra.mxu0 0.0
    %1327 = vmatprep.subr.mxu0 0.0
    %1328 = vmatpush1.msra.mxu0 0.0
    %1329 = vmatprep.subr.mxu0 0.0
    %1330 = vmatpush1.msra.mxu0 0.0
    %1331 = vmatprep.subr.mxu0 0.0
    %1332 = vmatpush1.msra.mxu0 0.0
    %1333 = vmatprep.subr.mxu0 0.0
    %1334 = vmatpush1.msra.mxu0 0.0
    %1335 = vmatprep.subr.mxu0 0.0
    %1336 = vmatpush1.msra.mxu0 0.0
    %1337 = vmatprep.subr.mxu0 0.0
    %1338 = vmatpush1.msra.mxu0 0.0
    %1339 = vmatprep.subr.mxu0 0.0
    %1340 = vmatpush1.msra.mxu0 0.0
    %1341 = vmatprep.subr.mxu0 0.0
    %1342 = vmatpush1.msra.mxu0 0.0
    %1343 = vmatprep.subr.mxu0 0.0
    %1344 = vmatpush1.msra.mxu0 0.0
    %1345 = vmatprep.subr.mxu0 0.0
    %1346 = vmatpush1.msra.mxu0 0.0
    %1347 = vmatprep.subr.mxu0 0.0
    %1348 = vmatpush1.msra.mxu0 0.0
    %1349 = vmatprep.subr.mxu0 0.0
    %1350 = vmatpush1.msra.mxu0 0.0
    %1351 = vmatprep.subr.mxu0 0.0
    %1352 = vmatpush1.msra.mxu0 0.0
    %1353 = vmatprep.subr.mxu0 0.0
    %1354 = vmatpush1.msra.mxu0 0.0
    %1355 = vmatprep.subr.mxu0 0.0
    %1356 = vmatpush1.msra.mxu0 0.0
    %1357 = vmatprep.subr.mxu0 0.0
    %1358 = vmatpush1.msra.mxu0 0.0
    %1359 = vmatprep.subr.mxu0 0.0
    %1360 = vmatpush1.msra.mxu0 0.0
    %1361 = vmatprep.subr.mxu0 0.0
    %1362 = vmatpush1.msra.mxu0 0.0
    %1363 = vmatprep.subr.mxu0 0.0
    %1364 = vmatpush1.msra.mxu0 0.0
    %1365 = vmatprep.mubr.f32.mxu0 0.0
    %1366 = vmatmul.mubr.f32.gmra.mrb[0].mxu0 %v1299
    %v1367 = vpop.f32.mrb[0].mxu0
    %v1368 = vadd.f32 0.0, %v1367
    %v1369 = vpop.f32.mrb[0].mxu0
    %1370 = vdwg.mxu0
    %1371 = vrot.lane.b32.xlu0 %v310, 120
    %v1372 = vpop.permute.xlu0 %1371
    %1373 = vrot.lane.b32.xlu0 %v409, 120
    %v1374 = vpop.permute.xlu0 %1373
    %1375 = vrot.lane.b32.xlu0 %v414, 120
    %v1376 = vpop.permute.xlu0 %1375
    %v1377 = vsel %vm422, %v1372, 0
    %v1379 = vsel %vm422, %v1374, 0
    %v1381 = vsel %vm422, %v1376, 0
    %1383 = vmatprep.subr.mxu0 0.0
    %1384 = vmatpush1.xpose.msra.mxu0 %v1379
    %1385 = vmatprep.subr.mxu0 0.0
    %1386 = vmatpush1.xpose.msra.mxu0 %v1381
    %1387 = vmatprep.subr.mxu0 0.0
    %1388 = vmatpush1.xpose.msra.mxu0 0.0
    %1389 = vmatprep.subr.mxu0 0.0
    %1390 = vmatpush1.xpose.msra.mxu0 0.0
    %1391 = vmatprep.subr.mxu0 0.0
    %1392 = vmatpush1.xpose.msra.mxu0 0.0
    %1393 = vmatprep.subr.mxu0 0.0
    %1394 = vmatpush1.xpose.msra.mxu0 0.0
    %1395 = vmatprep.subr.mxu0 0.0
    %1396 = vmatpush1.xpose.msra.mxu0 0.0
    %1397 = vmatprep.subr.mxu0 0.0
    %1398 = vmatpush1.xpose.msra.mxu0 0.0
    %1399 = vmatprep.subr.mxu0 0.0
    %1400 = vmatpush1.xpose.msra.mxu0 0.0
    %1401 = vmatprep.subr.mxu0 0.0
    %1402 = vmatpush1.xpose.msra.mxu0 0.0
    %1403 = vmatprep.subr.mxu0 0.0
    %1404 = vmatpush1.xpose.msra.mxu0 0.0
    %1405 = vmatprep.subr.mxu0 0.0
    %1406 = vmatpush1.xpose.msra.mxu0 0.0
    %1407 = vmatprep.subr.mxu0 0.0
    %1408 = vmatpush1.xpose.msra.mxu0 0.0
    %1409 = vmatprep.subr.mxu0 0.0
    %1410 = vmatpush1.xpose.msra.mxu0 0.0
    %1411 = vmatprep.subr.mxu0 0.0
    %1412 = vmatpush1.xpose.msra.mxu0 0.0
    %1413 = vmatprep.subr.mxu0 0.0
    %1414 = vmatpush1.xpose.msra.mxu0 0.0
    %1415 = vmatprep.subr.mxu0 0.0
    %1416 = vmatpush1.xpose.msra.mxu0 0.0
    %1417 = vmatprep.subr.mxu0 0.0
    %1418 = vmatpush1.xpose.msra.mxu0 0.0
    %1419 = vmatprep.subr.mxu0 0.0
    %1420 = vmatpush1.xpose.msra.mxu0 0.0
    %1421 = vmatprep.subr.mxu0 0.0
    %1422 = vmatpush1.xpose.msra.mxu0 0.0
    %1423 = vmatprep.subr.mxu0 0.0
    %1424 = vmatpush1.xpose.msra.mxu0 0.0
    %1425 = vmatprep.subr.mxu0 0.0
    %1426 = vmatpush1.xpose.msra.mxu0 0.0
    %1427 = vmatprep.subr.mxu0 0.0
    %1428 = vmatpush1.xpose.msra.mxu0 0.0
    %1429 = vmatprep.subr.mxu0 0.0
    %1430 = vmatpush1.xpose.msra.mxu0 0.0
    %1431 = vmatprep.subr.mxu0 0.0
    %1432 = vmatpush1.xpose.msra.mxu0 0.0
    %1433 = vmatprep.subr.mxu0 0.0
    %1434 = vmatpush1.xpose.msra.mxu0 0.0
    %1435 = vmatprep.subr.mxu0 0.0
    %1436 = vmatpush1.xpose.msra.mxu0 0.0
    %1437 = vmatprep.subr.mxu0 0.0
    %1438 = vmatpush1.xpose.msra.mxu0 0.0
    %1439 = vmatprep.subr.mxu0 0.0
    %1440 = vmatpush1.xpose.msra.mxu0 0.0
    %1441 = vmatprep.subr.mxu0 0.0
    %1442 = vmatpush1.xpose.msra.mxu0 0.0
    %1443 = vmatprep.subr.mxu0 0.0
    %1444 = vmatpush1.xpose.msra.mxu0 0.0
    %1445 = vmatprep.subr.mxu0 0.0
    %1446 = vmatpush1.xpose.msra.mxu0 0.0
    %1447 = vmatprep.mubr.f32.mxu0 0.0
    %1448 = vmatmul.mubr.f32.gmra.mrb[0].mxu0 %v1377
    %v1449 = vpop.f32.mrb[0].mxu0
    %v1450 = vadd.f32 0.0, %v1449
    %v1451 = vpop.f32.mrb[0].mxu0
    %1452 = vdwg.mxu0
    %v1453 = vsel %vm141, %v1450, -inf
    %1454 = vmax.xlane.f32.xlu0 %v1453
    %v1455 = vpop.xlane.xlu0 %1454
    %v1456 = vsub.f32 %v1450, %v1455
    %v1457 = vmul.f32 %v1456, 1.442695
    %v1458 = vpow.pop %v1457
    %v1459 = vsel %vm141, %v1458, 0.0
    %1460 = vadd.xlane.f32.xlu0 %v1459
    %v1461 = vpop.xlane.xlu0 %1460
    %v1462 = vrcp.pop %v1461
    %v1463 = vmul.f32 %v1458, %v1462
    %1464 = vrot.lane.b32.xlu0 %v409, 88
    %v1465 = vpop.permute.xlu0 %1464
    %1466 = vrot.lane.b32.xlu0 %v414, 88
    %v1467 = vpop.permute.xlu0 %1466
    %v1471 = vsel %vm141, %v1463, 0
    %1473 = vmatprep.subr.mxu0 0.0
    %1474 = vmatpush1.msra.mxu0 %v1465
    %1475 = vmatprep.subr.mxu0 0.0
    %1476 = vmatpush1.msra.mxu0 %v1467
    %1477 = vmatprep.subr.mxu0 0.0
    %1478 = vmatpush1.msra.mxu0 0.0
    %1479 = vmatprep.subr.mxu0 0.0
    %1480 = vmatpush1.msra.mxu0 0.0
    %1481 = vmatprep.subr.mxu0 0.0
    %1482 = vmatpush1.msra.mxu0 0.0
    %1483 = vmatprep.subr.mxu0 0.0
    %1484 = vmatpush1.msra.mxu0 0.0
    %1485 = vmatprep.subr.mxu0 0.0
    %1486 = vmatpush1.msra.mxu0 0.0
    %1487 = vmatprep.subr.mxu0 0.0
    %1488 = vmatpush1.msra.mxu0 0.0
    %1489 = vmatprep.subr.mxu0 0.0
    %1490 = vmatpush1.msra.mxu0 0.0
    %1491 = vmatprep.subr.mxu0 0.0
    %1492 = vmatpush1.msra.mxu0 0.0
    %1493 = vmatprep.subr.mxu0 0.0
    %1494 = vmatpush1.msra.mxu0 0.0
    %1495 = vmatprep.subr.mxu0 0.0
    %1496 = vmatpush1.msra.mxu0 0.0
    %1497 = vmatprep.subr.mxu0 0.0
    %1498 = vmatpush1.msra.mxu0 0.0
    %1499 = vmatprep.subr.mxu0 0.0
    %1500 = vmatpush1.msra.mxu0 0.0
    %1501 = vmatprep.subr.mxu0 0.0
    %1502 = vmatpush1.msra.mxu0 0.0
    %1503 = vmatprep.subr.mxu0 0.0
    %1504 = vmatpush1.msra.mxu0 0.0
    %1505 = vmatprep.subr.mxu0 0.0
    %1506 = vmatpush1.msra.mxu0 0.0
    %1507 = vmatprep.subr.mxu0 0.0
    %1508 = vmatpush1.msra.mxu0 0.0
    %1509 = vmatprep.subr.mxu0 0.0
    %1510 = vmatpush1.msra.mxu0 0.0
    %1511 = vmatprep.subr.mxu0 0.0
    %1512 = vmatpush1.msra.mxu0 0.0
    %1513 = vmatprep.subr.mxu0 0.0
    %1514 = vmatpush1.msra.mxu0 0.0
    %1515 = vmatprep.subr.mxu0 0.0
    %1516 = vmatpush1.msra.mxu0 0.0
    %1517 = vmatprep.subr.mxu0 0.0
    %1518 = vmatpush1.msra.mxu0 0.0
    %1519 = vmatprep.subr.mxu0 0.0
    %1520 = vmatpush1.msra.mxu0 0.0
    %1521 = vmatprep.subr.mxu0 0.0
    %1522 = vmatpush1.msra.mxu0 0.0
    %1523 = vmatprep.subr.mxu0 0.0
    %1524 = vmatpush1.msra.mxu0 0.0
    %1525 = vmatprep.subr.mxu0 0.0
    %1526 = vmatpush1.msra.mxu0 0.0
    %1527 = vmatprep.subr.mxu0 0.0
    %1528 = vmatpush1.msra.mxu0 0.0
    %1529 = vmatprep.subr.mxu0 0.0
    %1530 = vmatpush1.msra.mxu0 0.0
    %1531 = vmatprep.subr.mxu0 0.0
    %1532 = vmatpush1.msra.mxu0 0.0
    %1533 = vmatprep.subr.mxu0 0.0
    %1534 = vmatpush1.msra.mxu0 0.0
    %1535 = vmatprep.subr.mxu0 0.0
    %1536 = vmatpush1.msra.mxu0 0.0
    %1537 = vmatprep.mubr.f32.mxu0 0.0
    %1538 = vmatmul.mubr.f32.gmra.mrb[0].mxu0 %v1471
    %v1539 = vpop.f32.mrb[0].mxu0
    %v1540 = vadd.f32 0.0, %v1539
    %v1541 = vpop.f32.mrb[0].mxu0
    %1542 = vdwg.mxu0
    %1543 = vrot.lane.b32.xlu0 %v310, 112
    %v1544 = vpop.permute.xlu0 %1543
    %1545 = vrot.lane.b32.xlu0 %v409, 112
    %v1546 = vpop.permute.xlu0 %1545
    %1547 = vrot.lane.b32.xlu0 %v414, 112
    %v1548 = vpop.permute.xlu0 %1547
    %v1549 = vsel %vm422, %v1544, 0
    %v1551 = vsel %vm422, %v1546, 0
    %v1553 = vsel %vm422, %v1548, 0
    %1555 = vmatprep.subr.mxu0 0.0
    %1556 = vmatpush1.xpose.msra.mxu0 %v1551
    %1557 = vmatprep.subr.mxu0 0.0
    %1558 = vmatpush1.xpose.msra.mxu0 %v1553
    %1559 = vmatprep.subr.mxu0 0.0
    %1560 = vmatpush1.xpose.msra.mxu0 0.0
    %1561 = vmatprep.subr.mxu0 0.0
    %1562 = vmatpush1.xpose.msra.mxu0 0.0
    %1563 = vmatprep.subr.mxu0 0.0
    %1564 = vmatpush1.xpose.msra.mxu0 0.0
    %1565 = vmatprep.subr.mxu0 0.0
    %1566 = vmatpush1.xpose.msra.mxu0 0.0
    %1567 = vmatprep.subr.mxu0 0.0
    %1568 = vmatpush1.xpose.msra.mxu0 0.0
    %1569 = vmatprep.subr.mxu0 0.0
    %1570 = vmatpush1.xpose.msra.mxu0 0.0
    %1571 = vmatprep.subr.mxu0 0.0
    %1572 = vmatpush1.xpose.msra.mxu0 0.0
    %1573 = vmatprep.subr.mxu0 0.0
    %1574 = vmatpush1.xpose.msra.mxu0 0.0
    %1575 = vmatprep.subr.mxu0 0.0
    %1576 = vmatpush1.xpose.msra.mxu0 0.0
    %1577 = vmatprep.subr.mxu0 0.0
    %1578 = vmatpush1.xpose.msra.mxu0 0.0
    %1579 = vmatprep.subr.mxu0 0.0
    %1580 = vmatpush1.xpose.msra.mxu0 0.0
    %1581 = vmatprep.subr.mxu0 0.0
    %1582 = vmatpush1.xpose.msra.mxu0 0.0
    %1583 = vmatprep.subr.mxu0 0.0
    %1584 = vmatpush1.xpose.msra.mxu0 0.0
    %1585 = vmatprep.subr.mxu0 0.0
    %1586 = vmatpush1.xpose.msra.mxu0 0.0
    %1587 = vmatprep.subr.mxu0 0.0
    %1588 = vmatpush1.xpose.msra.mxu0 0.0
    %1589 = vmatprep.subr.mxu0 0.0
    %1590 = vmatpush1.xpose.msra.mxu0 0.0
    %1591 = vmatprep.subr.mxu0 0.0
    %1592 = vmatpush1.xpose.msra.mxu0 0.0
    %1593 = vmatprep.subr.mxu0 0.0
    %1594 = vmatpush1.xpose.msra.mxu0 0.0
    %1595 = vmatprep.subr.mxu0 0.0
    %1596 = vmatpush1.xpose.msra.mxu0 0.0
    %1597 = vmatprep.subr.mxu0 0.0
    %1598 = vmatpush1.xpose.msra.mxu0 0.0
    %1599 = vmatprep.subr.mxu0 0.0
    %1600 = vmatpush1.xpose.msra.mxu0 0.0
    %1601 = vmatprep.subr.mxu0 0.0
    %1602 = vmatpush1.xpose.msra.mxu0 0.0
    %1603 = vmatprep.subr.mxu0 0.0
    %1604 = vmatpush1.xpose.msra.mxu0 0.0
    %1605 = vmatprep.subr.mxu0 0.0
    %1606 = vmatpush1.xpose.msra.mxu0 0.0
    %1607 = vmatprep.subr.mxu0 0.0
    %1608 = vmatpush1.xpose.msra.mxu0 0.0
    %1609 = vmatprep.subr.mxu0 0.0
    %1610 = vmatpush1.xpose.msra.mxu0 0.0
    %1611 = vmatprep.subr.mxu0 0.0
    %1612 = vmatpush1.xpose.msra.mxu0 0.0
    %1613 = vmatprep.subr.mxu0 0.0
    %1614 = vmatpush1.xpose.msra.mxu0 0.0
    %1615 = vmatprep.subr.mxu0 0.0
    %1616 = vmatpush1.xpose.msra.mxu0 0.0
    %1617 = vmatprep.subr.mxu0 0.0
    %1618 = vmatpush1.xpose.msra.mxu0 0.0
    %1619 = vmatprep.mubr.f32.mxu0 0.0
    %1620 = vmatmul.mubr.f32.gmra.mrb[0].mxu0 %v1549
    %v1621 = vpop.f32.mrb[0].mxu0
    %v1622 = vadd.f32 0.0, %v1621
    %v1623 = vpop.f32.mrb[0].mxu0
    %1624 = vdwg.mxu0
    %v1625 = vsel %vm141, %v1622, -inf
    %1626 = vmax.xlane.f32.xlu0 %v1625
    %v1627 = vpop.xlane.xlu0 %1626
    %v1628 = vsub.f32 %v1622, %v1627
    %v1629 = vmul.f32 %v1628, 1.442695
    %v1630 = vpow.pop %v1629
    %v1631 = vsel %vm141, %v1630, 0.0
    %1632 = vadd.xlane.f32.xlu0 %v1631
    %v1633 = vpop.xlane.xlu0 %1632
    %v1634 = vrcp.pop %v1633
    %v1635 = vmul.f32 %v1630, %v1634
    %1636 = vrot.lane.b32.xlu0 %v409, 80
    %v1637 = vpop.permute.xlu0 %1636
    %1638 = vrot.lane.b32.xlu0 %v414, 80
    %v1639 = vpop.permute.xlu0 %1638
    %v1643 = vsel %vm141, %v1635, 0
    %1645 = vmatprep.subr.mxu0 0.0
    %1646 = vmatpush1.msra.mxu0 %v1637
    %1647 = vmatprep.subr.mxu0 0.0
    %1648 = vmatpush1.msra.mxu0 %v1639
    %1649 = vmatprep.subr.mxu0 0.0
    %1650 = vmatpush1.msra.mxu0 0.0
    %1651 = vmatprep.subr.mxu0 0.0
    %1652 = vmatpush1.msra.mxu0 0.0
    %1653 = vmatprep.subr.mxu0 0.0
    %1654 = vmatpush1.msra.mxu0 0.0
    %1655 = vmatprep.subr.mxu0 0.0
    %1656 = vmatpush1.msra.mxu0 0.0
    %1657 = vmatprep.subr.mxu0 0.0
    %1658 = vmatpush1.msra.mxu0 0.0
    %1659 = vmatprep.subr.mxu0 0.0
    %1660 = vmatpush1.msra.mxu0 0.0
    %1661 = vmatprep.subr.mxu0 0.0
    %1662 = vmatpush1.msra.mxu0 0.0
    %1663 = vmatprep.subr.mxu0 0.0
    %1664 = vmatpush1.msra.mxu0 0.0
    %1665 = vmatprep.subr.mxu0 0.0
    %1666 = vmatpush1.msra.mxu0 0.0
    %1667 = vmatprep.subr.mxu0 0.0
    %1668 = vmatpush1.msra.mxu0 0.0
    %1669 = vmatprep.subr.mxu0 0.0
    %1670 = vmatpush1.msra.mxu0 0.0
    %1671 = vmatprep.subr.mxu0 0.0
    %1672 = vmatpush1.msra.mxu0 0.0
    %1673 = vmatprep.subr.mxu0 0.0
    %1674 = vmatpush1.msra.mxu0 0.0
    %1675 = vmatprep.subr.mxu0 0.0
    %1676 = vmatpush1.msra.mxu0 0.0
    %1677 = vmatprep.subr.mxu0 0.0
    %1678 = vmatpush1.msra.mxu0 0.0
    %1679 = vmatprep.subr.mxu0 0.0
    %1680 = vmatpush1.msra.mxu0 0.0
    %1681 = vmatprep.subr.mxu0 0.0
    %1682 = vmatpush1.msra.mxu0 0.0
    %1683 = vmatprep.subr.mxu0 0.0
    %1684 = vmatpush1.msra.mxu0 0.0
    %1685 = vmatprep.subr.mxu0 0.0
    %1686 = vmatpush1.msra.mxu0 0.0
    %1687 = vmatprep.subr.mxu0 0.0
    %1688 = vmatpush1.msra.mxu0 0.0
    %1689 = vmatprep.subr.mxu0 0.0
    %1690 = vmatpush1.msra.mxu0 0.0
    %1691 = vmatprep.subr.mxu0 0.0
    %1692 = vmatpush1.msra.mxu0 0.0
    %1693 = vmatprep.subr.mxu0 0.0
    %1694 = vmatpush1.msra.mxu0 0.0
    %1695 = vmatprep.subr.mxu0 0.0
    %1696 = vmatpush1.msra.mxu0 0.0
    %1697 = vmatprep.subr.mxu0 0.0
    %1698 = vmatpush1.msra.mxu0 0.0
    %1699 = vmatprep.subr.mxu0 0.0
    %1700 = vmatpush1.msra.mxu0 0.0
    %1701 = vmatprep.subr.mxu0 0.0
    %1702 = vmatpush1.msra.mxu0 0.0
    %1703 = vmatprep.subr.mxu0 0.0
    %1704 = vmatpush1.msra.mxu0 0.0
    %1705 = vmatprep.subr.mxu0 0.0
    %1706 = vmatpush1.msra.mxu0 0.0
    %1707 = vmatprep.subr.mxu0 0.0
    %1708 = vmatpush1.msra.mxu0 0.0
    %1709 = vmatprep.mubr.f32.mxu0 0.0
    %1710 = vmatmul.mubr.f32.gmra.mrb[0].mxu0 %v1643
    %v1711 = vpop.f32.mrb[0].mxu0
    %v1712 = vadd.f32 0.0, %v1711
    %v1713 = vpop.f32.mrb[0].mxu0
    %1714 = vdwg.mxu0
    %1715 = vrot.lane.b32.xlu0 %v310, 104
    %v1716 = vpop.permute.xlu0 %1715
    %1717 = vrot.lane.b32.xlu0 %v409, 104
    %v1718 = vpop.permute.xlu0 %1717
    %1719 = vrot.lane.b32.xlu0 %v414, 104
    %v1720 = vpop.permute.xlu0 %1719
    %v1721 = vsel %vm422, %v1716, 0
    %v1723 = vsel %vm422, %v1718, 0
    %v1725 = vsel %vm422, %v1720, 0
    %1727 = vmatprep.subr.mxu0 0.0
    %1728 = vmatpush1.xpose.msra.mxu0 %v1723
    %1729 = vmatprep.subr.mxu0 0.0
    %1730 = vmatpush1.xpose.msra.mxu0 %v1725
    %1731 = vmatprep.subr.mxu0 0.0
    %1732 = vmatpush1.xpose.msra.mxu0 0.0
    %1733 = vmatprep.subr.mxu0 0.0
    %1734 = vmatpush1.xpose.msra.mxu0 0.0
    %1735 = vmatprep.subr.mxu0 0.0
    %1736 = vmatpush1.xpose.msra.mxu0 0.0
    %1737 = vmatprep.subr.mxu0 0.0
    %1738 = vmatpush1.xpose.msra.mxu0 0.0
    %1739 = vmatprep.subr.mxu0 0.0
    %1740 = vmatpush1.xpose.msra.mxu0 0.0
    %1741 = vmatprep.subr.mxu0 0.0
    %1742 = vmatpush1.xpose.msra.mxu0 0.0
    %1743 = vmatprep.subr.mxu0 0.0
    %1744 = vmatpush1.xpose.msra.mxu0 0.0
    %1745 = vmatprep.subr.mxu0 0.0
    %1746 = vmatpush1.xpose.msra.mxu0 0.0
    %1747 = vmatprep.subr.mxu0 0.0
    %1748 = vmatpush1.xpose.msra.mxu0 0.0
    %1749 = vmatprep.subr.mxu0 0.0
    %1750 = vmatpush1.xpose.msra.mxu0 0.0
    %1751 = vmatprep.subr.mxu0 0.0
    %1752 = vmatpush1.xpose.msra.mxu0 0.0
    %1753 = vmatprep.subr.mxu0 0.0
    %1754 = vmatpush1.xpose.msra.mxu0 0.0
    %1755 = vmatprep.subr.mxu0 0.0
    %1756 = vmatpush1.xpose.msra.mxu0 0.0
    %1757 = vmatprep.subr.mxu0 0.0
    %1758 = vmatpush1.xpose.msra.mxu0 0.0
    %1759 = vmatprep.subr.mxu0 0.0
    %1760 = vmatpush1.xpose.msra.mxu0 0.0
    %1761 = vmatprep.subr.mxu0 0.0
    %1762 = vmatpush1.xpose.msra.mxu0 0.0
    %1763 = vmatprep.subr.mxu0 0.0
    %1764 = vmatpush1.xpose.msra.mxu0 0.0
    %1765 = vmatprep.subr.mxu0 0.0
    %1766 = vmatpush1.xpose.msra.mxu0 0.0
    %1767 = vmatprep.subr.mxu0 0.0
    %1768 = vmatpush1.xpose.msra.mxu0 0.0
    %1769 = vmatprep.subr.mxu0 0.0
    %1770 = vmatpush1.xpose.msra.mxu0 0.0
    %1771 = vmatprep.subr.mxu0 0.0
    %1772 = vmatpush1.xpose.msra.mxu0 0.0
    %1773 = vmatprep.subr.mxu0 0.0
    %1774 = vmatpush1.xpose.msra.mxu0 0.0
    %1775 = vmatprep.subr.mxu0 0.0
    %1776 = vmatpush1.xpose.msra.mxu0 0.0
    %1777 = vmatprep.subr.mxu0 0.0
    %1778 = vmatpush1.xpose.msra.mxu0 0.0
    %1779 = vmatprep.subr.mxu0 0.0
    %1780 = vmatpush1.xpose.msra.mxu0 0.0
    %1781 = vmatprep.subr.mxu0 0.0
    %1782 = vmatpush1.xpose.msra.mxu0 0.0
    %1783 = vmatprep.subr.mxu0 0.0
    %1784 = vmatpush1.xpose.msra.mxu0 0.0
    %1785 = vmatprep.subr.mxu0 0.0
    %1786 = vmatpush1.xpose.msra.mxu0 0.0
    %1787 = vmatprep.subr.mxu0 0.0
    %1788 = vmatpush1.xpose.msra.mxu0 0.0
    %1789 = vmatprep.subr.mxu0 0.0
    %1790 = vmatpush1.xpose.msra.mxu0 0.0
    %1791 = vmatprep.mubr.f32.mxu0 0.0
    %1792 = vmatmul.mubr.f32.gmra.mrb[0].mxu0 %v1721
    %v1793 = vpop.f32.mrb[0].mxu0
    %v1794 = vadd.f32 0.0, %v1793
    %v1795 = vpop.f32.mrb[0].mxu0
    %1796 = vdwg.mxu0
    %v1797 = vsel %vm141, %v1794, -inf
    %1798 = vmax.xlane.f32.xlu0 %v1797
    %v1799 = vpop.xlane.xlu0 %1798
    %v1800 = vsub.f32 %v1794, %v1799
    %v1801 = vmul.f32 %v1800, 1.442695
    %v1802 = vpow.pop %v1801
    %v1803 = vsel %vm141, %v1802, 0.0
    %1804 = vadd.xlane.f32.xlu0 %v1803
    %v1805 = vpop.xlane.xlu0 %1804
    %v1806 = vrcp.pop %v1805
    %v1807 = vmul.f32 %v1802, %v1806
    %1808 = vrot.lane.b32.xlu0 %v409, 72
    %v1809 = vpop.permute.xlu0 %1808
    %1810 = vrot.lane.b32.xlu0 %v414, 72
    %v1811 = vpop.permute.xlu0 %1810
    %v1815 = vsel %vm141, %v1807, 0
    %1817 = vmatprep.subr.mxu0 0.0
    %1818 = vmatpush1.msra.mxu0 %v1809
    %1819 = vmatprep.subr.mxu0 0.0
    %1820 = vmatpush1.msra.mxu0 %v1811
    %1821 = vmatprep.subr.mxu0 0.0
    %1822 = vmatpush1.msra.mxu0 0.0
    %1823 = vmatprep.subr.mxu0 0.0
    %1824 = vmatpush1.msra.mxu0 0.0
    %1825 = vmatprep.subr.mxu0 0.0
    %1826 = vmatpush1.msra.mxu0 0.0
    %1827 = vmatprep.subr.mxu0 0.0
    %1828 = vmatpush1.msra.mxu0 0.0
    %1829 = vmatprep.subr.mxu0 0.0
    %1830 = vmatpush1.msra.mxu0 0.0
    %1831 = vmatprep.subr.mxu0 0.0
    %1832 = vmatpush1.msra.mxu0 0.0
    %1833 = vmatprep.subr.mxu0 0.0
    %1834 = vmatpush1.msra.mxu0 0.0
    %1835 = vmatprep.subr.mxu0 0.0
    %1836 = vmatpush1.msra.mxu0 0.0
    %1837 = vmatprep.subr.mxu0 0.0
    %1838 = vmatpush1.msra.mxu0 0.0
    %1839 = vmatprep.subr.mxu0 0.0
    %1840 = vmatpush1.msra.mxu0 0.0
    %1841 = vmatprep.subr.mxu0 0.0
    %1842 = vmatpush1.msra.mxu0 0.0
    %1843 = vmatprep.subr.mxu0 0.0
    %1844 = vmatpush1.msra.mxu0 0.0
    %1845 = vmatprep.subr.mxu0 0.0
    %1846 = vmatpush1.msra.mxu0 0.0
    %1847 = vmatprep.subr.mxu0 0.0
    %1848 = vmatpush1.msra.mxu0 0.0
    %1849 = vmatprep.subr.mxu0 0.0
    %1850 = vmatpush1.msra.mxu0 0.0
    %1851 = vmatprep.subr.mxu0 0.0
    %1852 = vmatpush1.msra.mxu0 0.0
    %1853 = vmatprep.subr.mxu0 0.0
    %1854 = vmatpush1.msra.mxu0 0.0
    %1855 = vmatprep.subr.mxu0 0.0
    %1856 = vmatpush1.msra.mxu0 0.0
    %1857 = vmatprep.subr.mxu0 0.0
    %1858 = vmatpush1.msra.mxu0 0.0
    %1859 = vmatprep.subr.mxu0 0.0
    %1860 = vmatpush1.msra.mxu0 0.0
    %1861 = vmatprep.subr.mxu0 0.0
    %1862 = vmatpush1.msra.mxu0 0.0
    %1863 = vmatprep.subr.mxu0 0.0
    %1864 = vmatpush1.msra.mxu0 0.0
    %1865 = vmatprep.subr.mxu0 0.0
    %1866 = vmatpush1.msra.mxu0 0.0
    %1867 = vmatprep.subr.mxu0 0.0
    %1868 = vmatpush1.msra.mxu0 0.0
    %1869 = vmatprep.subr.mxu0 0.0
    %1870 = vmatpush1.msra.mxu0 0.0
    %1871 = vmatprep.subr.mxu0 0.0
    %1872 = vmatpush1.msra.mxu0 0.0
    %1873 = vmatprep.subr.mxu0 0.0
    %1874 = vmatpush1.msra.mxu0 0.0
    %1875 = vmatprep.subr.mxu0 0.0
    %1876 = vmatpush1.msra.mxu0 0.0
    %1877 = vmatprep.subr.mxu0 0.0
    %1878 = vmatpush1.msra.mxu0 0.0
    %1879 = vmatprep.subr.mxu0 0.0
    %1880 = vmatpush1.msra.mxu0 0.0
    %1881 = vmatprep.mubr.f32.mxu0 0.0
    %1882 = vmatmul.mubr.f32.gmra.mrb[0].mxu0 %v1815
    %v1883 = vpop.f32.mrb[0].mxu0
    %v1884 = vadd.f32 0.0, %v1883
    %v1885 = vpop.f32.mrb[0].mxu0
    %1886 = vdwg.mxu0
    %1888 = vrot.lane.b32.xlu0 %v1540, 8
    %v1889 = vpop.permute.xlu0 %1888
    %1892 = vrot.lane.b32.xlu0 %v1712, 16
    %v1893 = vpop.permute.xlu0 %1892
    %1896 = vrot.lane.b32.xlu0 %v1884, 24
    %v1897 = vpop.permute.xlu0 %1896
    %v1899 = vsel %vm422, %v1368, %v1889
    %v1900 = vsel %vm141, %v1899, %v1893
    %v1901 = vsel %vm1122, %v1900, %v1897
    %v1903 = vsel %vm93, %v1901, 0
    %1905 = vmatprep.subr.mxu0 0.0
    %1906 = vmatpush1.msra.mxu0 %v417
    %1907 = vmatprep.subr.mxu0 0.0
    %1908 = vmatpush1.msra.mxu0 %v418
    %1909 = vmatprep.subr.mxu0 0.0
    %1910 = vmatpush1.msra.mxu0 %v419
    %1911 = vmatprep.subr.mxu0 0.0
    %1912 = vmatpush1.msra.mxu0 %v420
    %1913 = vmatprep.subr.mxu0 0.0
    %1914 = vmatpush1.msra.mxu0 0.0
    %1915 = vmatprep.subr.mxu0 0.0
    %1916 = vmatpush1.msra.mxu0 0.0
    %1917 = vmatprep.subr.mxu0 0.0
    %1918 = vmatpush1.msra.mxu0 0.0
    %1919 = vmatprep.subr.mxu0 0.0
    %1920 = vmatpush1.msra.mxu0 0.0
    %1921 = vmatprep.subr.mxu0 0.0
    %1922 = vmatpush1.msra.mxu0 0.0
    %1923 = vmatprep.subr.mxu0 0.0
    %1924 = vmatpush1.msra.mxu0 0.0
    %1925 = vmatprep.subr.mxu0 0.0
    %1926 = vmatpush1.msra.mxu0 0.0
    %1927 = vmatprep.subr.mxu0 0.0
    %1928 = vmatpush1.msra.mxu0 0.0
    %1929 = vmatprep.subr.mxu0 0.0
    %1930 = vmatpush1.msra.mxu0 0.0
    %1931 = vmatprep.subr.mxu0 0.0
    %1932 = vmatpush1.msra.mxu0 0.0
    %1933 = vmatprep.subr.mxu0 0.0
    %1934 = vmatpush1.msra.mxu0 0.0
    %1935 = vmatprep.subr.mxu0 0.0
    %1936 = vmatpush1.msra.mxu0 0.0
    %1937 = vmatprep.subr.mxu0 0.0
    %1938 = vmatpush1.msra.mxu0 0.0
    %1939 = vmatprep.subr.mxu0 0.0
    %1940 = vmatpush1.msra.mxu0 0.0
    %1941 = vmatprep.subr.mxu0 0.0
    %1942 = vmatpush1.msra.mxu0 0.0
    %1943 = vmatprep.subr.mxu0 0.0
    %1944 = vmatpush1.msra.mxu0 0.0
    %1945 = vmatprep.subr.mxu0 0.0
    %1946 = vmatpush1.msra.mxu0 0.0
    %1947 = vmatprep.subr.mxu0 0.0
    %1948 = vmatpush1.msra.mxu0 0.0
    %1949 = vmatprep.subr.mxu0 0.0
    %1950 = vmatpush1.msra.mxu0 0.0
    %1951 = vmatprep.subr.mxu0 0.0
    %1952 = vmatpush1.msra.mxu0 0.0
    %1953 = vmatprep.subr.mxu0 0.0
    %1954 = vmatpush1.msra.mxu0 0.0
    %1955 = vmatprep.subr.mxu0 0.0
    %1956 = vmatpush1.msra.mxu0 0.0
    %1957 = vmatprep.subr.mxu0 0.0
    %1958 = vmatpush1.msra.mxu0 0.0
    %1959 = vmatprep.subr.mxu0 0.0
    %1960 = vmatpush1.msra.mxu0 0.0
    %1961 = vmatprep.subr.mxu0 0.0
    %1962 = vmatpush1.msra.mxu0 0.0
    %1963 = vmatprep.subr.mxu0 0.0
    %1964 = vmatpush1.msra.mxu0 0.0
    %1965 = vmatprep.subr.mxu0 0.0
    %1966 = vmatpush1.msra.mxu0 0.0
    %1967 = vmatprep.subr.mxu0 0.0
    %1968 = vmatpush1.msra.mxu0 0.0
    %1969 = vmatprep.mubr.f32.mxu0 0.0
    %1970 = vmatmul.mubr.f32.gmra.mrb[0].mxu0 %v1903
    %v1971 = vpop.f32.mrb[0].mxu0
    %v1972 = vadd.f32 %v1127, %v1971
    %v1973 = vpop.f32.mrb[0].mxu0
    %1974 = vdwg.mxu0
    %v1975 = vadd.f32 %v1972, %v86
    %v1976 = vld [vmem:[#allocation5 + $0x7] sm:$0x1]
    %v1977 = vld [vmem:[#allocation5 + $0x8] sm:$0x1]
    %v1978 = vsel %vm93, %v1201, 0.0
    %1979 = vadd.xlane.f32.xlu0 %v1978
    %v1980 = vpop.xlane.xlu0 %1979
    %v1981 = vsel %vm93, %v1975, 0.0
    %1982 = vadd.xlane.f32.xlu0 %v1981
    %v1983 = vpop.xlane.xlu0 %1982
    %v1984 = vmul.f32 %v1980, %v100
    %v1985 = vmul.f32 %v1983, %v100
    %v1986 = vmul.f32 %v1201, %v1201
    %v1987 = vmul.f32 %v1975, %v1975
    %v1988 = vsel %vm93, %v1986, 0.0
    %1989 = vadd.xlane.f32.xlu0 %v1988
    %v1990 = vpop.xlane.xlu0 %1989
    %v1991 = vsel %vm93, %v1987, 0.0
    %1992 = vadd.xlane.f32.xlu0 %v1991
    %v1993 = vpop.xlane.xlu0 %1992
    %v1994 = vmul.f32 %v1990, %v100
    %v1995 = vmul.f32 %v1993, %v100
    %v1996 = vmul.f32 %v1984, %v1984
    %v1997 = vmul.f32 %v1985, %v1985
    %v1998 = vsub.f32 %v1994, %v1996
    %v1999 = vsub.f32 %v1995, %v1997
    %v2000 = vmax.f32 %v1998, 0.0
    %v2001 = vmax.f32 %v1999, 0.0
    %v2002 = vsub.f32 %v1201, %v1984
    %v2003 = vsub.f32 %v1975, %v1985
    %v2004 = vadd.f32 %v2000, 1e-05
    %v2005 = vadd.f32 %v2001, 1e-05
    %v2006 = vrsqrt.pop %v2004
    %v2007 = vrsqrt.pop %v2005
    %v2008 = vmul.f32 %v2002, %v2006
    %v2009 = vmul.f32 %v2003, %v2007
    %v2010 = vlaneseq
    %v2011 = vshrl.u32 %v2010, 7
    %v2012 = vsub.s32 0, %v2011
    %v2013 = vrot.slane %v1976, %v2012
    %v2014 = vmul.f32 %v2008, %v2013
    %v2015 = vmul.f32 %v2009, %v2013
    %v2016 = vlaneseq
    %v2017 = vshrl.u32 %v2016, 7
    %v2018 = vsub.s32 0, %v2017
    %v2019 = vrot.slane %v1977, %v2018
    %v2020 = vadd.f32 %v2014, %v2019
    %v2021 = vadd.f32 %v2015, %v2019
    %v2022 = vld [vmem:[#allocation8] sm:$0xff]
    %v2023 = vld [vmem:[#allocation8 + $0x8] sm:$0xff]
    %v2024 = vld [vmem:[#allocation8 + $0x10] sm:$0xff]
    %v2025 = vld [vmem:[#allocation8 + $0x18] sm:$0xff]
    %v2026 = vld [vmem:[#allocation5 + $0x9] sm:$0x1]
    %v2027 = vlaneseq
    %v2028 = vshrl.u32 %v2027, 7
    %v2029 = vsub.s32 0, %v2028
    %v2030 = vrot.slane %v2026, %v2029
    %v2032 = vsel %vm93, %v2020, 0
    %v2035 = vsel %vm93, %v2021, 0
    %2037 = vmatprep.subr.mxu0 0.0
    %2038 = vmatpush1.msra.mxu0 %v2022
    %2039 = vmatprep.subr.mxu0 0.0
    %2040 = vmatpush1.msra.mxu0 %v2023
    %2041 = vmatprep.subr.mxu0 0.0
    %2042 = vmatpush1.msra.mxu0 %v2024
    %2043 = vmatprep.subr.mxu0 0.0
    %2044 = vmatpush1.msra.mxu0 %v2025
    %2045 = vmatprep.subr.mxu0 0.0
    %2046 = vmatpush1.msra.mxu0 0.0
    %2047 = vmatprep.subr.mxu0 0.0
    %2048 = vmatpush1.msra.mxu0 0.0
    %2049 = vmatprep.subr.mxu0 0.0
    %2050 = vmatpush1.msra.mxu0 0.0
    %2051 = vmatprep.subr.mxu0 0.0
    %2052 = vmatpush1.msra.mxu0 0.0
    %2053 = vmatprep.subr.mxu0 0.0
    %2054 = vmatpush1.msra.mxu0 0.0
    %2055 = vmatprep.subr.mxu0 0.0
    %2056 = vmatpush1.msra.mxu0 0.0
    %2057 = vmatprep.subr.mxu0 0.0
    %2058 = vmatpush1.msra.mxu0 0.0
    %2059 = vmatprep.subr.mxu0 0.0
    %2060 = vmatpush1.msra.mxu0 0.0
    %2061 = vmatprep.subr.mxu0 0.0
    %2062 = vmatpush1.msra.mxu0 0.0
    %2063 = vmatprep.subr.mxu0 0.0
    %2064 = vmatpush1.msra.mxu0 0.0
    %2065 = vmatprep.subr.mxu0 0.0
    %2066 = vmatpush1.msra.mxu0 0.0
    %2067 = vmatprep.subr.mxu0 0.0
    %2068 = vmatpush1.msra.mxu0 0.0
    %2069 = vmatprep.subr.mxu0 0.0
    %2070 = vmatpush1.msra.mxu0 0.0
    %2071 = vmatprep.subr.mxu0 0.0
    %2072 = vmatpush1.msra.mxu0 0.0
    %2073 = vmatprep.subr.mxu0 0.0
    %2074 = vmatpush1.msra.mxu0 0.0
    %2075 = vmatprep.subr.mxu0 0.0
    %2076 = vmatpush1.msra.mxu0 0.0
    %2077 = vmatprep.subr.mxu0 0.0
    %2078 = vmatpush1.msra.mxu0 0.0
    %2079 = vmatprep.subr.mxu0 0.0
    %2080 = vmatpush1.msra.mxu0 0.0
    %2081 = vmatprep.subr.mxu0 0.0
    %2082 = vmatpush1.msra.mxu0 0.0
    %2083 = vmatprep.subr.mxu0 0.0
    %2084 = vmatpush1.msra.mxu0 0.0
    %2085 = vmatprep.subr.mxu0 0.0
    %2086 = vmatpush1.msra.mxu0 0.0
    %2087 = vmatprep.subr.mxu0 0.0
    %2088 = vmatpush1.msra.mxu0 0.0
    %2089 = vmatprep.subr.mxu0 0.0
    %2090 = vmatpush1.msra.mxu0 0.0
    %2091 = vmatprep.subr.mxu0 0.0
    %2092 = vmatpush1.msra.mxu0 0.0
    %2093 = vmatprep.subr.mxu0 0.0
    %2094 = vmatpush1.msra.mxu0 0.0
    %2095 = vmatprep.subr.mxu0 0.0
    %2096 = vmatpush1.msra.mxu0 0.0
    %2097 = vmatprep.subr.mxu0 0.0
    %2098 = vmatpush1.msra.mxu0 0.0
    %2099 = vmatprep.subr.mxu0 0.0
    %2100 = vmatpush1.msra.mxu0 0.0
    %2101 = vmatprep.mubr.f32.mxu0 0.0
    %2102 = vmatmul.mubr.f32.gmra.mrb[0].mxu0 %v2032
    %v2103 = vpop.f32.mrb[0].mxu0
    %v2104 = vadd.f32 %v2030, %v2103
    %v2105 = vpop.f32.mrb[0].mxu0
    %2106 = vmatprep.mubr.f32.mxu0 0.0
    %2107 = vmatmul.mubr.f32.gmra.mrb[0].mxu0 %v2035
    %v2108 = vpop.f32.mrb[0].mxu0
    %v2109 = vadd.f32 %v2030, %v2108
    %v2110 = vpop.f32.mrb[0].mxu0
    %2111 = vdwg.mxu0
    %v2112 = vmul.f32 %v2104, 0.5
    %v2113 = vmul.f32 %v2109, 0.5
    %v2114 = vmul.f32 %v2104, 0.044715
    %v2115 = vmul.f32 %v2109, 0.044715
    %v2116 = vmul.f32 %v2114, %v2104
    %v2117 = vmul.f32 %v2115, %v2109
    %v2118 = vmul.f32 %v2116, %v2104
    %v2119 = vmul.f32 %v2117, %v2109
    %v2120 = vadd.f32 %v2104, %v2118
    %v2121 = vadd.f32 %v2109, %v2119
    %v2122 = vmul.f32 %v2120, 0.7978846
    %v2123 = vmul.f32 %v2121, 0.7978846
    %v2124 = vtanh.pop %v2122
    %v2125 = vtanh.pop %v2123
    %v2126 = vadd.f32 %v2124, 1.0
    %v2127 = vadd.f32 %v2125, 1.0
    %v2128 = vmul.f32 %v2112, %v2126
    %v2129 = vmul.f32 %v2113, %v2127
    %v2130 = vld [vmem:[%s7] sm:$0xff]
    %v2131 = vld [vmem:[%s7 + $0x8] sm:$0xff]
    %v2132 = vld [vmem:[%s7 + $0x10] sm:$0xff]
    %v2133 = vld [vmem:[%s7 + $0x18] sm:$0xff]
    %v2134 = vld [vmem:[%s7 + $0x20] sm:$0xff]
    %v2135 = vld [vmem:[%s7 + $0x28] sm:$0xff]
    %v2136 = vld [vmem:[%s7 + $0x30] sm:$0xff]
    %v2137 = vld [vmem:[%s7 + $0x38] sm:$0xff]
    %v2138 = vld [vmem:[#allocation5 + $0xa] sm:$0x1]
    %v2139 = vlaneseq
    %v2140 = vshrl.u32 %v2139, 7
    %v2141 = vsub.s32 0, %v2140
    %v2142 = vrot.slane %v2138, %v2141
    %vm2143 = vcmask 523264
    %v2145 = vsel %vm2143, %v2128, 0
    %v2148 = vsel %vm2143, %v2129, 0
    %2150 = vmatprep.subr.mxu0 0.0
    %2151 = vmatpush1.msra.mxu0 %v2130
    %2152 = vmatprep.subr.mxu0 0.0
    %2153 = vmatpush1.msra.mxu0 %v2131
    %2154 = vmatprep.subr.mxu0 0.0
    %2155 = vmatpush1.msra.mxu0 %v2132
    %2156 = vmatprep.subr.mxu0 0.0
    %2157 = vmatpush1.msra.mxu0 %v2133
    %2158 = vmatprep.subr.mxu0 0.0
    %2159 = vmatpush1.msra.mxu0 %v2134
    %2160 = vmatprep.subr.mxu0 0.0
    %2161 = vmatpush1.msra.mxu0 %v2135
    %2162 = vmatprep.subr.mxu0 0.0
    %2163 = vmatpush1.msra.mxu0 %v2136
    %2164 = vmatprep.subr.mxu0 0.0
    %2165 = vmatpush1.msra.mxu0 %v2137
    %2166 = vmatprep.subr.mxu0 0.0
    %2167 = vmatpush1.msra.mxu0 0.0
    %2168 = vmatprep.subr.mxu0 0.0
    %2169 = vmatpush1.msra.mxu0 0.0
    %2170 = vmatprep.subr.mxu0 0.0
    %2171 = vmatpush1.msra.mxu0 0.0
    %2172 = vmatprep.subr.mxu0 0.0
    %2173 = vmatpush1.msra.mxu0 0.0
    %2174 = vmatprep.subr.mxu0 0.0
    %2175 = vmatpush1.msra.mxu0 0.0
    %2176 = vmatprep.subr.mxu0 0.0
    %2177 = vmatpush1.msra.mxu0 0.0
    %2178 = vmatprep.subr.mxu0 0.0
    %2179 = vmatpush1.msra.mxu0 0.0
    %2180 = vmatprep.subr.mxu0 0.0
    %2181 = vmatpush1.msra.mxu0 0.0
    %2182 = vmatprep.subr.mxu0 0.0
    %2183 = vmatpush1.msra.mxu0 0.0
    %2184 = vmatprep.subr.mxu0 0.0
    %2185 = vmatpush1.msra.mxu0 0.0
    %2186 = vmatprep.subr.mxu0 0.0
    %2187 = vmatpush1.msra.mxu0 0.0
    %2188 = vmatprep.subr.mxu0 0.0
    %2189 = vmatpush1.msra.mxu0 0.0
    %2190 = vmatprep.subr.mxu0 0.0
    %2191 = vmatpush1.msra.mxu0 0.0
    %2192 = vmatprep.subr.mxu0 0.0
    %2193 = vmatpush1.msra.mxu0 0.0
    %2194 = vmatprep.subr.mxu0 0.0
    %2195 = vmatpush1.msra.mxu0 0.0
    %2196 = vmatprep.subr.mxu0 0.0
    %2197 = vmatpush1.msra.mxu0 0.0
    %2198 = vmatprep.subr.mxu0 0.0
    %2199 = vmatpush1.msra.mxu0 0.0
    %2200 = vmatprep.subr.mxu0 0.0
    %2201 = vmatpush1.msra.mxu0 0.0
    %2202 = vmatprep.subr.mxu0 0.0
    %2203 = vmatpush1.msra.mxu0 0.0
    %2204 = vmatprep.subr.mxu0 0.0
    %2205 = vmatpush1.msra.mxu0 0.0
    %2206 = vmatprep.subr.mxu0 0.0
    %2207 = vmatpush1.msra.mxu0 0.0
    %2208 = vmatprep.subr.mxu0 0.0
    %2209 = vmatpush1.msra.mxu0 0.0
    %2210 = vmatprep.subr.mxu0 0.0
    %2211 = vmatpush1.msra.mxu0 0.0
    %2212 = vmatprep.subr.mxu0 0.0
    %2213 = vmatpush1.msra.mxu0 0.0
    %2214 = vmatprep.mubr.f32.mxu0 0.0
    %2215 = vmatmul.mubr.f32.gmra.mrb[0].mxu0 %v2145
    %v2216 = vpop.f32.mrb[0].mxu0
    %v2217 = vadd.f32 %v2142, %v2216
    %v2218 = vpop.f32.mrb[0].mxu0
    %2219 = vmatprep.mubr.f32.mxu0 0.0
    %2220 = vmatmul.mubr.f32.gmra.mrb[0].mxu0 %v2148
    %v2221 = vpop.f32.mrb[0].mxu0
    %v2222 = vadd.f32 %v2142, %v2221
    %v2223 = vpop.f32.mrb[0].mxu0
    %2224 = vdwg.mxu0
    %v2225 = vadd.f32 %v2217, %v1201
    %v2226 = vadd.f32 %v2222, %v1975
    %2229 = vrot.lane.b32.xlu0 %v2225, 32
    %v2230 = vpop.permute.xlu0 %2229
    %2231 = vrot.lane.b32.xlu0 %v2226, 32
    %v2232 = vpop.permute.xlu0 %2231
    %v2235 = vsel %vm93, %v1201, %v2230
    %v2236 = vsel %vm93, %v1975, %v2232
    %v2237 = vsel %vm2143, %v2235, 0.0
    %v2238 = vsel %vm2143, %v2236, 0.0
    %2239 = vst [vmem:[#allocation10] sm:$0xff] %v2237
    %2240 = vst [vmem:[#allocation10 + $0x8] sm:$0xff] %v2238
    // Predicated region
    $region50: #{tpu_custom_call.1} parent=1 // pred_check
      _
    $region51: #{tpu_custom_call.1} parent=1 // pred_check_branch
      %2242 = sbr.rel (0) target = $region53
    $region52: #{tpu_custom_call.1} parent=1 // pred_region
      %s2244 = ssub.s32 256, 256
      %2245 = vsyncadd [#allocation4], %s2244
      %s2246 = sshll.u32 [#allocation10], 4
      %s2247 = int_to_ptr.vmem [resolvable:$true] %s2246
      %2252 = dma.vmem_to_hbm [thread:$0]  %s2247, 256, %s8, [#allocation4], 128, 128, 8
    $region53: #{tpu_custom_call.1} parent=1 // pred_fallthru
      _
    // Predicated region
    $region54: #{tpu_custom_call.1} parent=1 // pred_check
      _
    $region55: #{tpu_custom_call.1} parent=1 // pred_check_branch
      %2254 = sbr.rel (0) target = $region57
    $region56: #{tpu_custom_call.1} parent=1 // pred_region
      %2255 = dma.done [#allocation4], 256
    $region57: #{tpu_custom_call.1} parent=1 // pred_fallthru
      _
    %2256 = vsyncpa [#allocation3], 1
    %2257 = vsyncpa [#allocation6], 1
    %2258 = vsyncpa [#allocation9], 1
    %2259 = vsyncpa [#allocation4], 1

</llo_original>
